<compile_context>
chip_gen: v5e
topology: v5e:2x2
jax: 0.10.0
libtpu: 0.0.40
codegen_flags: <defaults>
</compile_context>

<pallas_src>
import numpy as np
import jax
import jax.numpy as jnp
from jax import lax
from jax.experimental import pallas as pl
from jax.experimental.pallas import tpu as pltpu


def _cdiv(a, b):
    return -(-a // b)


def _round_up(v, m):
    return _cdiv(v, m) * m


def second_fpn_conv_layer(x, weight, bias, gamma, beta, *, stride, padding,
                          eps=1e-5, compute_dtype=jnp.bfloat16):
    """x: (N,C_in,H,W); weight: (C_in,C_out,k,k) (PyTorch ConvTranspose2d)."""
    n, c_in, h, w = x.shape
    ci2, c_out, k, k2 = weight.shape
    assert ci2 == c_in and k2 == k
    s, p = int(stride), int(padding)

    h_out = (h - 1) * s - 2 * p + k
    w_out = (w - 1) * s - 2 * p + k
    assert h_out > 0 and w_out > 0

    # ---- static phase / tap bookkeeping (sub-pixel decomposition) ----------
    # Output row oh = a*s + off(rh), off = (rh - p) % s, gets taps kh with
    # kh % s == rh, reading input row ih = a + c(rh,kh), c = (off + p - kh)//s.
    Mh, Mw = _cdiv(h_out, s), _cdiv(w_out, s)
    k_lists = [[kk for kk in range(k) if kk % s == r] for r in range(s)]
    offs = [(r - p) % s for r in range(s)]
    c_of = {(r, kk): (offs[r] + p - kk) // s
            for r in range(s) for kk in k_lists[r]}
    c_vals = list(c_of.values()) or [0]
    pad_lo = max(0, -min(c_vals))
    D = max(c_vals) + pad_lo                 # max shifted tap offset (>= 0)
    n_phase = s * s

    # Per-phase exact tap lists: (row offset, col offset, packed-weight index).
    w_keys, widx_of, taps_per_phase = [], {}, []
    for rh in range(s):
        for rw in range(s):
            taps = []
            for kh in k_lists[rh]:
                for kw in k_lists[rw]:
                    if (kh, kw) not in widx_of:
                        widx_of[(kh, kw)] = len(w_keys)
                        w_keys.append((kh, kw))
                    taps.append((c_of[(rh, kh)] + pad_lo,
                                 c_of[(rw, kw)] + pad_lo,
                                 widx_of[(kh, kw)]))
            taps_per_phase.append(taps)
    n_w = len(w_keys)

    # Number of valid output positions per phase along each axis.
    ah_ph = [max(0, (h_out - offs[r] + s - 1) // s) for r in range(s)]
    bw_ph = [max(0, (w_out - offs[r] + s - 1) // s) for r in range(s)]

    C_inp = _round_up(c_in, 8)
    C_outp = _round_up(c_out, 8)
    Wp = Mw + D                              # window width incl. tap halo

    in_bytes = 2 if compute_dtype == jnp.bfloat16 else 4
    mid_bytes = in_bytes

    def _blk_bytes(tr_):
        lo = _round_up(tr_ * Wp, 128)
        li = _round_up(D * Wp + D + lo, 128)
        one = (C_inp * li * in_bytes
               + n_phase * C_outp * lo * (mid_bytes + 4))
        return 2 * one                       # double buffering

    budget = 24 * 1024 * 1024
    m_tiles = 1
    while _cdiv(Mh, m_tiles) > 8 and _blk_bytes(_cdiv(Mh, m_tiles)) > budget:
        m_tiles += 1
    tr = _cdiv(Mh, m_tiles)                  # balanced row tiles
    m_tiles = _cdiv(Mh, tr)
    L_out = _round_up(tr * Wp, 128)          # lane-dense flattened (row,col)
    L_in = _round_up(D * Wp + D + L_out, 128)

    # ---- wrapper glue: ONE lightly padded window view of the input ---------
    H_need = m_tiles * tr + D
    xp = jnp.pad(x, ((0, 0), (0, C_inp - c_in),
                     (pad_lo, max(0, H_need - pad_lo - h)),
                     (pad_lo, max(0, Wp - pad_lo - w))))
    xp = xp[:, :, :H_need, :Wp].astype(compute_dtype)
    x_flat = xp.reshape(n, C_inp, H_need * Wp)
    flat_need = (m_tiles - 1) * tr * Wp + L_in
    if flat_need > H_need * Wp:
        x_flat = jnp.pad(x_flat, ((0, 0), (0, 0), (0, flat_need - H_need * Wp)))
    if m_tiles == 1:
        x_win = x_flat[:, None, :, :L_in]
    else:  # overlapping row windows; only the D-row halo is duplicated
        x_win = jnp.stack([x_flat[:, :, mt * tr * Wp: mt * tr * Wp + L_in]
                           for mt in range(m_tiles)], axis=1)

    # Packed per-tap weights, (C_out, C_in) so the MXU output is (C_out, M).
    w_list = [jnp.pad(weight[:, :, kh, kw].T.astype(jnp.float32),
                      ((0, C_outp - c_out), (0, C_inp - c_in)))
              for (kh, kw) in w_keys]
    w_all = jnp.stack(w_list, 0).astype(compute_dtype)     # (n_w, C_outp, C_inp)
    bias_p = jnp.pad(bias.astype(jnp.float32),
                     (0, C_outp - c_out)).reshape(C_outp, 1)

    # Static lane -> column index pattern (avoids in-kernel integer div/mod).
    bidx = jnp.asarray((np.arange(L_out) % Wp)[None, :], dtype=jnp.int32)

    mid_dtype = compute_dtype

    # ---- kernel 1: per-(batch, row-tile) phase convs + fused BN stats ------
    def conv_stats_kernel(x_ref, w_ref, b_ref, bidx_ref, o_ref, st_ref):
        mt = pl.program_id(1)
        jlane = lax.broadcasted_iota(jnp.int32, (1, L_out), 1)
        bvec = bidx_ref[...]
        s1 = jnp.zeros((C_outp, 1), jnp.float32)
        s2 = jnp.zeros((C_outp, 1), jnp.float32)
        for ph in range(n_phase):
            rh, rw = ph // s, ph % s
            acc = jnp.zeros((C_outp, L_out), jnp.float32)
            for (dh, dw, widx) in taps_per_phase[ph]:
                xt = x_ref[0, 0, :, pl.ds(dh * Wp + dw, L_out)]  # (C_inp, L_out)
                acc = acc + jnp.dot(w_ref[widx], xt,
                                    preferred_element_type=jnp.float32)
            acc = acc + b_ref[...]                               # conv bias
            o_ref[0, 0, ph] = acc.astype(o_ref.dtype)
            # BN statistics: mask lanes outside the true output extent.
            limit = jnp.minimum(jnp.int32(tr), jnp.int32(ah_ph[rh]) - mt * tr)
            valid = (bvec < bw_ph[rw]) & (jlane < limit * Wp)
            msk = valid.astype(jnp.float32)
            am = acc * msk
            s1 = s1 + jnp.sum(am, axis=1, keepdims=True)
            s2 = s2 + jnp.sum(am * acc, axis=1, keepdims=True)
        st_ref[0, :, 0:1] = s1
        st_ref[0, :, 128:129] = s2

    conv_out, stats = pl.pallas_call(
        conv_stats_kernel,
        out_shape=(
            jax.ShapeDtypeStruct((n, m_tiles, n_phase, C_outp, L_out), mid_dtype),
            jax.ShapeDtypeStruct((n * m_tiles, C_outp, 256), jnp.float32),
        ),
        grid=(n, m_tiles),
        in_specs=[
            pl.BlockSpec((1, 1, C_inp, L_in), lambda i, j: (i, j, 0, 0)),
            pl.BlockSpec((n_w, C_outp, C_inp), lambda i, j: (0, 0, 0)),
            pl.BlockSpec((C_outp, 1), lambda i, j: (0, 0)),
            pl.BlockSpec((1, L_out), lambda i, j: (0, 0)),
        ],
        out_specs=(
            pl.BlockSpec((1, 1, n_phase, C_outp, L_out),
                         lambda i, j: (i, j, 0, 0, 0)),
            pl.BlockSpec((1, C_outp, 256), lambda i, j: (i * m_tiles + j, 0, 0)),
        ),
        compiler_params=pltpu.CompilerParams(
            dimension_semantics=("parallel", "parallel")),
    )(x_win, w_all, bias_p, bidx)

    # ---- finalize batch statistics (tiny per-channel math; plain JAX) ------
    s1 = jnp.sum(stats[:, :, 0], axis=0)
    s2 = jnp.sum(stats[:, :, 128], axis=0)
    count = float(n * h_out * w_out)
    mean = s1 / count
    var = jnp.maximum(s2 / count - mean * mean, 0.0)       # E[x^2] - E[x]^2
    inv = lax.rsqrt(var + eps)
    g = jnp.pad(gamma.astype(jnp.float32), (0, C_outp - c_out))
    bt = jnp.pad(beta.astype(jnp.float32), (0, C_outp - c_out))
    scale = (g * inv).reshape(C_outp, 1)
    shift = (bt - mean * g * inv).reshape(C_outp, 1)

    # ---- kernel 2: tiled scale/shift + ReLU (lane-dense blocks) ------------
    def bn_relu_kernel(y_ref, sc_ref, sh_ref, o_ref):
        y = y_ref[0, 0].astype(jnp.float32)
        o_ref[0, 0] = jnp.maximum(y * sc_ref[...] + sh_ref[...], 0.0)

    y = pl.pallas_call(
        bn_relu_kernel,
        out_shape=jax.ShapeDtypeStruct((n, m_tiles, n_phase, C_outp, L_out),
                                       jnp.float32),
        grid=(n, m_tiles),
        in_specs=[
            pl.BlockSpec((1, 1, n_phase, C_outp, L_out),
                         lambda i, j: (i, j, 0, 0, 0)),
            pl.BlockSpec((C_outp, 1), lambda i, j: (0, 0)),
            pl.BlockSpec((C_outp, 1), lambda i, j: (0, 0)),
        ],
        out_specs=pl.BlockSpec((1, 1, n_phase, C_outp, L_out),
                               lambda i, j: (i, j, 0, 0, 0)),
        compiler_params=pltpu.CompilerParams(
            dimension_semantics=("parallel", "parallel")),
    )(conv_out, scale, shift)

    # ---- depth-to-space phase reassembly into NCHW (one XLA transpose) -----
    y = y[:, :, :, :c_out, :tr * Wp]
    y = y.reshape(n, m_tiles, s, s, c_out, tr, Wp)[..., :Mw]
    perm = np.array([(o + p) % s for o in range(s)])        # offset -> phase
    y = y[:, :, perm][:, :, :, perm]       # dims (n, mt, off_h, off_w, co, a, b)
    y = y.transpose(0, 4, 1, 5, 2, 6, 3).reshape(n, c_out,
                                                 m_tiles * tr * s, Mw * s)
    return y[:, :, :h_out, :w_out]


# ----------------------------------------------------------------------------
# Pure-JAX reference (for correctness check)
# ----------------------------------------------------------------------------
def reference(x, weight, bias, gamma, beta, *, stride, padding, eps=1e-5):
    k = weight.shape[2]
    w_equiv = jnp.flip(weight, axis=(2, 3)).transpose(1, 0, 2, 3)  # (Cout,Cin,k,k)
    pad_amt = k - 1 - padding
    y = lax.conv_general_dilated(
        x.astype(jnp.float32), w_equiv.astype(jnp.float32),
        window_strides=(1, 1),
        padding=[(pad_amt, pad_amt), (pad_amt, pad_amt)],
        lhs_dilation=(stride, stride),
        dimension_numbers=("NCHW", "OIHW", "NCHW"),
        precision=lax.Precision.HIGHEST,
    ) + bias[None, :, None, None]
    mean = jnp.mean(y, axis=(0, 2, 3), keepdims=True)
    var = jnp.mean(jnp.square(y - mean), axis=(0, 2, 3), keepdims=True)
    yn = (y - mean) * lax.rsqrt(var + eps)
    yn = yn * gamma[None, :, None, None] + beta[None, :, None, None]
    return jnp.maximum(yn, 0.0)


if __name__ == "__main__":
    # N=2, C_in=4, C_out=8, H=W=16, kernel=3, stride=2, padding=1 -> (2,8,31,31)
    N, C_IN, C_OUT, H, W = 2, 4, 8, 16, 16
    K, STRIDE, PADDING = 3, 2, 1

    key = jax.random.PRNGKey(0)
    kx, kw, kb, kg, kbt = jax.random.split(key, 5)
    x = jax.random.normal(kx, (N, C_IN, H, W), jnp.float32)
    # ConvTranspose2d weight layout: (in_channels, out_channels, kH, kW)
    weight = 0.1 * jax.random.normal(kw, (C_IN, C_OUT, K, K), jnp.float32)
    bias = 0.1 * jax.random.normal(kb, (C_OUT,), jnp.float32)
    gamma = 1.0 + 0.1 * jax.random.normal(kg, (C_OUT,), jnp.float32)
    beta = 0.1 * jax.random.normal(kbt, (C_OUT,), jnp.float32)

    h_out = (H - 1) * STRIDE - 2 * PADDING + K
    w_out = (W - 1) * STRIDE - 2 * PADDING + K

    ref = np.asarray(jax.block_until_ready(
        reference(x, weight, bias, gamma, beta, stride=STRIDE, padding=PADDING)))
    assert ref.shape == (N, C_OUT, h_out, w_out)

    # Algorithmic-correctness check: f32 operands/intermediates, tight tol.
    out32 = np.asarray(jax.block_until_ready(
        second_fpn_conv_layer(x, weight, bias, gamma, beta, stride=STRIDE,
                              padding=PADDING, compute_dtype=jnp.float32)))
    assert out32.shape == ref.shape
    assert np.allclose(out32, ref, atol=1e-3, rtol=1e-3), \
        f"f32 Pallas result mismatch (max err {np.abs(out32 - ref).max()})"

    # Fast path: bf16 MXU operands + bf16 conv intermediate (f32 accumulation).
    out16 = np.asarray(jax.block_until_ready(
        second_fpn_conv_layer(x, weight, bias, gamma, beta, stride=STRIDE,
                              padding=PADDING, compute_dtype=jnp.bfloat16)))
    assert out16.shape == ref.shape
    assert np.allclose(out16, ref, atol=6e-2, rtol=6e-2), \
        f"bf16 Pallas result mismatch (max err {np.abs(out16 - ref).max()})"

    print("KERNEL_OK")
</pallas_src>

<mosaic_0001>
module attributes {stable_mosaic.version = 11 : i64} {
  func.func @conv_stats_kernel(%arg0: i32, %arg1: i32, %arg2: memref<1x1x8x512xf32, #tpu.memory_space<vmem>>, %arg3: memref<9x8x8xf32, #tpu.memory_space<vmem>>, %arg4: memref<8x1xf32, #tpu.memory_space<vmem>>, %arg5: memref<1x384xi32, #tpu.memory_space<vmem>>, %arg6: memref<1x1x4x8x384xf32, #tpu.memory_space<vmem>>, %arg7: memref<1x8x256xf32, #tpu.memory_space<vmem>>) attributes {dimension_semantics = [#tpu.dimension_semantics<parallel>, #tpu.dimension_semantics<parallel>], iteration_bounds = array<i64: 2, 1>, scalar_prefetch = 0 : i64, scratch_operands = 0 : i64, tpu.core_type = #tpu.core_type<tc>, window_params = [{transform_indices = @transform_0, window_bounds = array<i64: 1, 1, 8, 512>}, {pipeline_mode = #tpu.pipeline_mode<synchronous>, transform_indices = @transform_1, window_bounds = array<i64: 9, 8, 8>}, {pipeline_mode = #tpu.pipeline_mode<synchronous>, transform_indices = @transform_2, window_bounds = array<i64: 8, 1>}, {pipeline_mode = #tpu.pipeline_mode<synchronous>, transform_indices = @transform_3, window_bounds = array<i64: 1, 384>}, {transform_indices = @transform_4, window_bounds = array<i64: 1, 1, 4, 8, 384>}, {transform_indices = @transform_5, window_bounds = array<i64: 1, 8, 256>}]} {
    %0 = tpu.iota {dimensions = array<i32: 1>} : vector<1x384xi32>
    %c0 = arith.constant 0 : index
    %c0_0 = arith.constant 0 : index
    %1 = vector.load %arg5[%c0, %c0_0] : memref<1x384xi32, #tpu.memory_space<vmem>>, vector<1x384xi32>
    %cst = arith.constant 0.000000e+00 : f32
    %2 = vector.broadcast %cst : f32 to vector<8x1xf32>
    %cst_1 = arith.constant 0.000000e+00 : f32
    %3 = vector.broadcast %cst_1 : f32 to vector<8x1xf32>
    %cst_2 = arith.constant 0.000000e+00 : f32
    %4 = vector.broadcast %cst_2 : f32 to vector<8x384xf32>
    %c0_3 = arith.constant 0 : index
    %c0_4 = arith.constant 0 : index
    %c0_5 = arith.constant 0 : index
    %c18 = arith.constant 18 : index
    %5 = vector.load %arg2[%c0_3, %c0_4, %c0_5, %c18] : memref<1x1x8x512xf32, #tpu.memory_space<vmem>>, vector<1x1x8x384xf32>
    %6 = vector.shape_cast %5 : vector<1x1x8x384xf32> to vector<8x384xf32>
    %c0_6 = arith.constant 0 : index
    %c0_7 = arith.constant 0 : index
    %c0_8 = arith.constant 0 : index
    %7 = vector.load %arg3[%c0_6, %c0_7, %c0_8] : memref<9x8x8xf32, #tpu.memory_space<vmem>>, vector<1x8x8xf32>
    %8 = vector.shape_cast %7 : vector<1x8x8xf32> to vector<8x8xf32>
    %cst_9 = arith.constant dense<0.000000e+00> : vector<8x384xf32>
    %9 = tpu.matmul %8, %6, %cst_9 {dimension_numbers = #tpu.dot_dimension_numbers<[1], [0], [0], [1], [0, 0, 1, 1], [], []>} : vector<8x8xf32>, vector<8x384xf32>, vector<8x384xf32> -> vector<8x384xf32>
    %10 = arith.addf %4, %9 : vector<8x384xf32>
    %c0_10 = arith.constant 0 : index
    %c0_11 = arith.constant 0 : index
    %c0_12 = arith.constant 0 : index
    %c17 = arith.constant 17 : index
    %11 = vector.load %arg2[%c0_10, %c0_11, %c0_12, %c17] : memref<1x1x8x512xf32, #tpu.memory_space<vmem>>, vector<1x1x8x384xf32>
    %12 = vector.shape_cast %11 : vector<1x1x8x384xf32> to vector<8x384xf32>
    %c1 = arith.constant 1 : index
    %c0_13 = arith.constant 0 : index
    %c0_14 = arith.constant 0 : index
    %13 = vector.load %arg3[%c1, %c0_13, %c0_14] : memref<9x8x8xf32, #tpu.memory_space<vmem>>, vector<1x8x8xf32>
    %14 = vector.shape_cast %13 : vector<1x8x8xf32> to vector<8x8xf32>
    %cst_15 = arith.constant dense<0.000000e+00> : vector<8x384xf32>
    %15 = tpu.matmul %14, %12, %cst_15 {dimension_numbers = #tpu.dot_dimension_numbers<[1], [0], [0], [1], [0, 0, 1, 1], [], []>} : vector<8x8xf32>, vector<8x384xf32>, vector<8x384xf32> -> vector<8x384xf32>
    %16 = arith.addf %10, %15 : vector<8x384xf32>
    %c0_16 = arith.constant 0 : index
    %c0_17 = arith.constant 0 : index
    %c0_18 = arith.constant 0 : index
    %c1_19 = arith.constant 1 : index
    %17 = vector.load %arg2[%c0_16, %c0_17, %c0_18, %c1_19] : memref<1x1x8x512xf32, #tpu.memory_space<vmem>>, vector<1x1x8x384xf32>
    %18 = vector.shape_cast %17 : vector<1x1x8x384xf32> to vector<8x384xf32>
    %c2 = arith.constant 2 : index
    %c0_20 = arith.constant 0 : index
    %c0_21 = arith.constant 0 : index
    %19 = vector.load %arg3[%c2, %c0_20, %c0_21] : memref<9x8x8xf32, #tpu.memory_space<vmem>>, vector<1x8x8xf32>
    %20 = vector.shape_cast %19 : vector<1x8x8xf32> to vector<8x8xf32>
    %cst_22 = arith.constant dense<0.000000e+00> : vector<8x384xf32>
    %21 = tpu.matmul %20, %18, %cst_22 {dimension_numbers = #tpu.dot_dimension_numbers<[1], [0], [0], [1], [0, 0, 1, 1], [], []>} : vector<8x8xf32>, vector<8x384xf32>, vector<8x384xf32> -> vector<8x384xf32>
    %22 = arith.addf %16, %21 : vector<8x384xf32>
    %c0_23 = arith.constant 0 : index
    %c0_24 = arith.constant 0 : index
    %c0_25 = arith.constant 0 : index
    %c0_26 = arith.constant 0 : index
    %23 = vector.load %arg2[%c0_23, %c0_24, %c0_25, %c0_26] : memref<1x1x8x512xf32, #tpu.memory_space<vmem>>, vector<1x1x8x384xf32>
    %24 = vector.shape_cast %23 : vector<1x1x8x384xf32> to vector<8x384xf32>
    %c3 = arith.constant 3 : index
    %c0_27 = arith.constant 0 : index
    %c0_28 = arith.constant 0 : index
    %25 = vector.load %arg3[%c3, %c0_27, %c0_28] : memref<9x8x8xf32, #tpu.memory_space<vmem>>, vector<1x8x8xf32>
    %26 = vector.shape_cast %25 : vector<1x8x8xf32> to vector<8x8xf32>
    %cst_29 = arith.constant dense<0.000000e+00> : vector<8x384xf32>
    %27 = tpu.matmul %26, %24, %cst_29 {dimension_numbers = #tpu.dot_dimension_numbers<[1], [0], [0], [1], [0, 0, 1, 1], [], []>} : vector<8x8xf32>, vector<8x384xf32>, vector<8x384xf32> -> vector<8x384xf32>
    %28 = arith.addf %22, %27 : vector<8x384xf32>
    %c0_30 = arith.constant 0 : index
    %c0_31 = arith.constant 0 : index
    %29 = vector.load %arg4[%c0_30, %c0_31] : memref<8x1xf32, #tpu.memory_space<vmem>>, vector<8x1xf32>
    %30 = vector.broadcast %29 : vector<8x1xf32> to vector<8x384xf32>
    %31 = arith.addf %28, %30 : vector<8x384xf32>
    %c0_32 = arith.constant 0 : index
    %c0_33 = arith.constant 0 : index
    %c0_34 = arith.constant 0 : index
    %c0_35 = arith.constant 0 : index
    %c0_36 = arith.constant 0 : index
    %32 = vector.load %arg6[%c0_32, %c0_33, %c0_34, %c0_35, %c0_36] : memref<1x1x4x8x384xf32, #tpu.memory_space<vmem>>, vector<1x1x1x8x384xf32>
    %33 = vector.shape_cast %32 : vector<1x1x1x8x384xf32> to vector<8x384xf32>
    %34 = vector.shape_cast %31 : vector<8x384xf32> to vector<1x1x1x8x384xf32>
    tpu.vector_store %arg6[%c0_32, %c0_33, %c0_34, %c0_35, %c0_36], %34 {strides = array<i32>} : memref<1x1x4x8x384xf32, #tpu.memory_space<vmem>>, vector<1x1x1x8x384xf32>,
    %c16_i32 = arith.constant 16 : i32
    %35 = arith.muli %arg1, %c16_i32 : i32
    %c15_i32 = arith.constant 15 : i32
    %36 = arith.subi %c15_i32, %35 : i32
    %c16_i32_37 = arith.constant 16 : i32
    %37 = arith.minsi %c16_i32_37, %36 : i32
    %c15_i32_38 = arith.constant 15 : i32
    %38 = vector.broadcast %c15_i32_38 : i32 to vector<1x384xi32>
    %39 = arith.cmpi slt, %1, %38 : vector<1x384xi32>
    %c17_i32 = arith.constant 17 : i32
    %40 = arith.muli %37, %c17_i32 : i32
    %41 = vector.broadcast %40 : i32 to vector<1x384xi32>
    %42 = arith.cmpi slt, %0, %41 : vector<1x384xi32>
    %43 = arith.andi %39, %42 : vector<1x384xi1>
    %44 = arith.extui %43 : vector<1x384xi1> to vector<1x384xi32>
    %45 = arith.sitofp %44 : vector<1x384xi32> to vector<1x384xf32>
    %46 = vector.broadcast %45 : vector<1x384xf32> to vector<8x384xf32>
    %47 = arith.mulf %31, %46 : vector<8x384xf32>
    %cst_39 = arith.constant dense<0.000000e+00> : vector<8xf32>
    %48 = vector.multi_reduction <add>, %47, %cst_39 [1] : vector<8x384xf32> to vector<8xf32>
    %49 = vector.shape_cast %48 : vector<8xf32> to vector<8x1xf32>
    %50 = arith.addf %2, %49 : vector<8x1xf32>
    %51 = arith.mulf %47, %31 : vector<8x384xf32>
    %cst_40 = arith.constant dense<0.000000e+00> : vector<8xf32>
    %52 = vector.multi_reduction <add>, %51, %cst_40 [1] : vector<8x384xf32> to vector<8xf32>
    %53 = vector.shape_cast %52 : vector<8xf32> to vector<8x1xf32>
    %54 = arith.addf %3, %53 : vector<8x1xf32>
    %cst_41 = arith.constant 0.000000e+00 : f32
    %55 = vector.broadcast %cst_41 : f32 to vector<8x384xf32>
    %c0_42 = arith.constant 0 : index
    %c0_43 = arith.constant 0 : index
    %c0_44 = arith.constant 0 : index
    %c17_45 = arith.constant 17 : index
    %56 = vector.load %arg2[%c0_42, %c0_43, %c0_44, %c17_45] : memref<1x1x8x512xf32, #tpu.memory_space<vmem>>, vector<1x1x8x384xf32>
    %57 = vector.shape_cast %56 : vector<1x1x8x384xf32> to vector<8x384xf32>
    %c4 = arith.constant 4 : index
    %c0_46 = arith.constant 0 : index
    %c0_47 = arith.constant 0 : index
    %58 = vector.load %arg3[%c4, %c0_46, %c0_47] : memref<9x8x8xf32, #tpu.memory_space<vmem>>, vector<1x8x8xf32>
    %59 = vector.shape_cast %58 : vector<1x8x8xf32> to vector<8x8xf32>
    %cst_48 = arith.constant dense<0.000000e+00> : vector<8x384xf32>
    %60 = tpu.matmul %59, %57, %cst_48 {dimension_numbers = #tpu.dot_dimension_numbers<[1], [0], [0], [1], [0, 0, 1, 1], [], []>} : vector<8x8xf32>, vector<8x384xf32>, vector<8x384xf32> -> vector<8x384xf32>
    %61 = arith.addf %55, %60 : vector<8x384xf32>
    %c0_49 = arith.constant 0 : index
    %c0_50 = arith.constant 0 : index
    %c0_51 = arith.constant 0 : index
    %c0_52 = arith.constant 0 : index
    %62 = vector.load %arg2[%c0_49, %c0_50, %c0_51, %c0_52] : memref<1x1x8x512xf32, #tpu.memory_space<vmem>>, vector<1x1x8x384xf32>
    %63 = vector.shape_cast %62 : vector<1x1x8x384xf32> to vector<8x384xf32>
    %c5 = arith.constant 5 : index
    %c0_53 = arith.constant 0 : index
    %c0_54 = arith.constant 0 : index
    %64 = vector.load %arg3[%c5, %c0_53, %c0_54] : memref<9x8x8xf32, #tpu.memory_space<vmem>>, vector<1x8x8xf32>
    %65 = vector.shape_cast %64 : vector<1x8x8xf32> to vector<8x8xf32>
    %cst_55 = arith.constant dense<0.000000e+00> : vector<8x384xf32>
    %66 = tpu.matmul %65, %63, %cst_55 {dimension_numbers = #tpu.dot_dimension_numbers<[1], [0], [0], [1], [0, 0, 1, 1], [], []>} : vector<8x8xf32>, vector<8x384xf32>, vector<8x384xf32> -> vector<8x384xf32>
    %67 = arith.addf %61, %66 : vector<8x384xf32>
    %c0_56 = arith.constant 0 : index
    %c0_57 = arith.constant 0 : index
    %68 = vector.load %arg4[%c0_56, %c0_57] : memref<8x1xf32, #tpu.memory_space<vmem>>, vector<8x1xf32>
    %69 = vector.broadcast %68 : vector<8x1xf32> to vector<8x384xf32>
    %70 = arith.addf %67, %69 : vector<8x384xf32>
    %c0_58 = arith.constant 0 : index
    %c0_59 = arith.constant 0 : index
    %c1_60 = arith.constant 1 : index
    %c0_61 = arith.constant 0 : index
    %c0_62 = arith.constant 0 : index
    %71 = vector.load %arg6[%c0_58, %c0_59, %c1_60, %c0_61, %c0_62] : memref<1x1x4x8x384xf32, #tpu.memory_space<vmem>>, vector<1x1x1x8x384xf32>
    %72 = vector.shape_cast %71 : vector<1x1x1x8x384xf32> to vector<8x384xf32>
    %73 = vector.shape_cast %70 : vector<8x384xf32> to vector<1x1x1x8x384xf32>
    tpu.vector_store %arg6[%c0_58, %c0_59, %c1_60, %c0_61, %c0_62], %73 {strides = array<i32>} : memref<1x1x4x8x384xf32, #tpu.memory_space<vmem>>, vector<1x1x1x8x384xf32>,
    %c16_i32_63 = arith.constant 16 : i32
    %74 = arith.muli %arg1, %c16_i32_63 : i32
    %c15_i32_64 = arith.constant 15 : i32
    %75 = arith.subi %c15_i32_64, %74 : i32
    %c16_i32_65 = arith.constant 16 : i32
    %76 = arith.minsi %c16_i32_65, %75 : i32
    %c16_i32_66 = arith.constant 16 : i32
    %77 = vector.broadcast %c16_i32_66 : i32 to vector<1x384xi32>
    %78 = arith.cmpi slt, %1, %77 : vector<1x384xi32>
    %c17_i32_67 = arith.constant 17 : i32
    %79 = arith.muli %76, %c17_i32_67 : i32
    %80 = vector.broadcast %79 : i32 to vector<1x384xi32>
    %81 = arith.cmpi slt, %0, %80 : vector<1x384xi32>
    %82 = arith.andi %78, %81 : vector<1x384xi1>
    %83 = arith.extui %82 : vector<1x384xi1> to vector<1x384xi32>
    %84 = arith.sitofp %83 : vector<1x384xi32> to vector<1x384xf32>
    %85 = vector.broadcast %84 : vector<1x384xf32> to vector<8x384xf32>
    %86 = arith.mulf %70, %85 : vector<8x384xf32>
    %cst_68 = arith.constant dense<0.000000e+00> : vector<8xf32>
    %87 = vector.multi_reduction <add>, %86, %cst_68 [1] : vector<8x384xf32> to vector<8xf32>
    %88 = vector.shape_cast %87 : vector<8xf32> to vector<8x1xf32>
    %89 = arith.addf %50, %88 : vector<8x1xf32>
    %90 = arith.mulf %86, %70 : vector<8x384xf32>
    %cst_69 = arith.constant dense<0.000000e+00> : vector<8xf32>
    %91 = vector.multi_reduction <add>, %90, %cst_69 [1] : vector<8x384xf32> to vector<8xf32>
    %92 = vector.shape_cast %91 : vector<8xf32> to vector<8x1xf32>
    %93 = arith.addf %54, %92 : vector<8x1xf32>
    %cst_70 = arith.constant 0.000000e+00 : f32
    %94 = vector.broadcast %cst_70 : f32 to vector<8x384xf32>
    %c0_71 = arith.constant 0 : index
    %c0_72 = arith.constant 0 : index
    %c0_73 = arith.constant 0 : index
    %c1_74 = arith.constant 1 : index
    %95 = vector.load %arg2[%c0_71, %c0_72, %c0_73, %c1_74] : memref<1x1x8x512xf32, #tpu.memory_space<vmem>>, vector<1x1x8x384xf32>
    %96 = vector.shape_cast %95 : vector<1x1x8x384xf32> to vector<8x384xf32>
    %c6 = arith.constant 6 : index
    %c0_75 = arith.constant 0 : index
    %c0_76 = arith.constant 0 : index
    %97 = vector.load %arg3[%c6, %c0_75, %c0_76] : memref<9x8x8xf32, #tpu.memory_space<vmem>>, vector<1x8x8xf32>
    %98 = vector.shape_cast %97 : vector<1x8x8xf32> to vector<8x8xf32>
    %cst_77 = arith.constant dense<0.000000e+00> : vector<8x384xf32>
    %99 = tpu.matmul %98, %96, %cst_77 {dimension_numbers = #tpu.dot_dimension_numbers<[1], [0], [0], [1], [0, 0, 1, 1], [], []>} : vector<8x8xf32>, vector<8x384xf32>, vector<8x384xf32> -> vector<8x384xf32>
    %100 = arith.addf %94, %99 : vector<8x384xf32>
    %c0_78 = arith.constant 0 : index
    %c0_79 = arith.constant 0 : index
    %c0_80 = arith.constant 0 : index
    %c0_81 = arith.constant 0 : index
    %101 = vector.load %arg2[%c0_78, %c0_79, %c0_80, %c0_81] : memref<1x1x8x512xf32, #tpu.memory_space<vmem>>, vector<1x1x8x384xf32>
    %102 = vector.shape_cast %101 : vector<1x1x8x384xf32> to vector<8x384xf32>
    %c7 = arith.constant 7 : index
    %c0_82 = arith.constant 0 : index
    %c0_83 = arith.constant 0 : index
    %103 = vector.load %arg3[%c7, %c0_82, %c0_83] : memref<9x8x8xf32, #tpu.memory_space<vmem>>, vector<1x8x8xf32>
    %104 = vector.shape_cast %103 : vector<1x8x8xf32> to vector<8x8xf32>
    %cst_84 = arith.constant dense<0.000000e+00> : vector<8x384xf32>
    %105 = tpu.matmul %104, %102, %cst_84 {dimension_numbers = #tpu.dot_dimension_numbers<[1], [0], [0], [1], [0, 0, 1, 1], [], []>} : vector<8x8xf32>, vector<8x384xf32>, vector<8x384xf32> -> vector<8x384xf32>
    %106 = arith.addf %100, %105 : vector<8x384xf32>
    %c0_85 = arith.constant 0 : index
    %c0_86 = arith.constant 0 : index
    %107 = vector.load %arg4[%c0_85, %c0_86] : memref<8x1xf32, #tpu.memory_space<vmem>>, vector<8x1xf32>
    %108 = vector.broadcast %107 : vector<8x1xf32> to vector<8x384xf32>
    %109 = arith.addf %106, %108 : vector<8x384xf32>
    %c0_87 = arith.constant 0 : index
    %c0_88 = arith.constant 0 : index
    %c2_89 = arith.constant 2 : index
    %c0_90 = arith.constant 0 : index
    %c0_91 = arith.constant 0 : index
    %110 = vector.load %arg6[%c0_87, %c0_88, %c2_89, %c0_90, %c0_91] : memref<1x1x4x8x384xf32, #tpu.memory_space<vmem>>, vector<1x1x1x8x384xf32>
    %111 = vector.shape_cast %110 : vector<1x1x1x8x384xf32> to vector<8x384xf32>
    %112 = vector.shape_cast %109 : vector<8x384xf32> to vector<1x1x1x8x384xf32>
    tpu.vector_store %arg6[%c0_87, %c0_88, %c2_89, %c0_90, %c0_91], %112 {strides = array<i32>} : memref<1x1x4x8x384xf32, #tpu.memory_space<vmem>>, vector<1x1x1x8x384xf32>,
    %c16_i32_92 = arith.constant 16 : i32
    %113 = arith.muli %arg1, %c16_i32_92 : i32
    %c16_i32_93 = arith.constant 16 : i32
    %114 = arith.subi %c16_i32_93, %113 : i32
    %c16_i32_94 = arith.constant 16 : i32
    %115 = arith.minsi %c16_i32_94, %114 : i32
    %c15_i32_95 = arith.constant 15 : i32
    %116 = vector.broadcast %c15_i32_95 : i32 to vector<1x384xi32>
    %117 = arith.cmpi slt, %1, %116 : vector<1x384xi32>
    %c17_i32_96 = arith.constant 17 : i32
    %118 = arith.muli %115, %c17_i32_96 : i32
    %119 = vector.broadcast %118 : i32 to vector<1x384xi32>
    %120 = arith.cmpi slt, %0, %119 : vector<1x384xi32>
    %121 = arith.andi %117, %120 : vector<1x384xi1>
    %122 = arith.extui %121 : vector<1x384xi1> to vector<1x384xi32>
    %123 = arith.sitofp %122 : vector<1x384xi32> to vector<1x384xf32>
    %124 = vector.broadcast %123 : vector<1x384xf32> to vector<8x384xf32>
    %125 = arith.mulf %109, %124 : vector<8x384xf32>
    %cst_97 = arith.constant dense<0.000000e+00> : vector<8xf32>
    %126 = vector.multi_reduction <add>, %125, %cst_97 [1] : vector<8x384xf32> to vector<8xf32>
    %127 = vector.shape_cast %126 : vector<8xf32> to vector<8x1xf32>
    %128 = arith.addf %89, %127 : vector<8x1xf32>
    %129 = arith.mulf %125, %109 : vector<8x384xf32>
    %cst_98 = arith.constant dense<0.000000e+00> : vector<8xf32>
    %130 = vector.multi_reduction <add>, %129, %cst_98 [1] : vector<8x384xf32> to vector<8xf32>
    %131 = vector.shape_cast %130 : vector<8xf32> to vector<8x1xf32>
    %132 = arith.addf %93, %131 : vector<8x1xf32>
    %cst_99 = arith.constant 0.000000e+00 : f32
    %133 = vector.broadcast %cst_99 : f32 to vector<8x384xf32>
    %c0_100 = arith.constant 0 : index
    %c0_101 = arith.constant 0 : index
    %c0_102 = arith.constant 0 : index
    %c0_103 = arith.constant 0 : index
    %134 = vector.load %arg2[%c0_100, %c0_101, %c0_102, %c0_103] : memref<1x1x8x512xf32, #tpu.memory_space<vmem>>, vector<1x1x8x384xf32>
    %135 = vector.shape_cast %134 : vector<1x1x8x384xf32> to vector<8x384xf32>
    %c8 = arith.constant 8 : index
    %c0_104 = arith.constant 0 : index
    %c0_105 = arith.constant 0 : index
    %136 = vector.load %arg3[%c8, %c0_104, %c0_105] : memref<9x8x8xf32, #tpu.memory_space<vmem>>, vector<1x8x8xf32>
    %137 = vector.shape_cast %136 : vector<1x8x8xf32> to vector<8x8xf32>
    %cst_106 = arith.constant dense<0.000000e+00> : vector<8x384xf32>
    %138 = tpu.matmul %137, %135, %cst_106 {dimension_numbers = #tpu.dot_dimension_numbers<[1], [0], [0], [1], [0, 0, 1, 1], [], []>} : vector<8x8xf32>, vector<8x384xf32>, vector<8x384xf32> -> vector<8x384xf32>
    %139 = arith.addf %133, %138 : vector<8x384xf32>
    %c0_107 = arith.constant 0 : index
    %c0_108 = arith.constant 0 : index
    %140 = vector.load %arg4[%c0_107, %c0_108] : memref<8x1xf32, #tpu.memory_space<vmem>>, vector<8x1xf32>
    %141 = vector.broadcast %140 : vector<8x1xf32> to vector<8x384xf32>
    %142 = arith.addf %139, %141 : vector<8x384xf32>
    %c0_109 = arith.constant 0 : index
    %c0_110 = arith.constant 0 : index
    %c3_111 = arith.constant 3 : index
    %c0_112 = arith.constant 0 : index
    %c0_113 = arith.constant 0 : index
    %143 = vector.load %arg6[%c0_109, %c0_110, %c3_111, %c0_112, %c0_113] : memref<1x1x4x8x384xf32, #tpu.memory_space<vmem>>, vector<1x1x1x8x384xf32>
    %144 = vector.shape_cast %143 : vector<1x1x1x8x384xf32> to vector<8x384xf32>
    %145 = vector.shape_cast %142 : vector<8x384xf32> to vector<1x1x1x8x384xf32>
    tpu.vector_store %arg6[%c0_109, %c0_110, %c3_111, %c0_112, %c0_113], %145 {strides = array<i32>} : memref<1x1x4x8x384xf32, #tpu.memory_space<vmem>>, vector<1x1x1x8x384xf32>,
    %c16_i32_114 = arith.constant 16 : i32
    %146 = arith.muli %arg1, %c16_i32_114 : i32
    %c16_i32_115 = arith.constant 16 : i32
    %147 = arith.subi %c16_i32_115, %146 : i32
    %c16_i32_116 = arith.constant 16 : i32
    %148 = arith.minsi %c16_i32_116, %147 : i32
    %c16_i32_117 = arith.constant 16 : i32
    %149 = vector.broadcast %c16_i32_117 : i32 to vector<1x384xi32>
    %150 = arith.cmpi slt, %1, %149 : vector<1x384xi32>
    %c17_i32_118 = arith.constant 17 : i32
    %151 = arith.muli %148, %c17_i32_118 : i32
    %152 = vector.broadcast %151 : i32 to vector<1x384xi32>
    %153 = arith.cmpi slt, %0, %152 : vector<1x384xi32>
    %154 = arith.andi %150, %153 : vector<1x384xi1>
    %155 = arith.extui %154 : vector<1x384xi1> to vector<1x384xi32>
    %156 = arith.sitofp %155 : vector<1x384xi32> to vector<1x384xf32>
    %157 = vector.broadcast %156 : vector<1x384xf32> to vector<8x384xf32>
    %158 = arith.mulf %142, %157 : vector<8x384xf32>
    %cst_119 = arith.constant dense<0.000000e+00> : vector<8xf32>
    %159 = vector.multi_reduction <add>, %158, %cst_119 [1] : vector<8x384xf32> to vector<8xf32>
    %160 = vector.shape_cast %159 : vector<8xf32> to vector<8x1xf32>
    %161 = arith.addf %128, %160 : vector<8x1xf32>
    %162 = arith.mulf %158, %142 : vector<8x384xf32>
    %cst_120 = arith.constant dense<0.000000e+00> : vector<8xf32>
    %163 = vector.multi_reduction <add>, %162, %cst_120 [1] : vector<8x384xf32> to vector<8xf32>
    %164 = vector.shape_cast %163 : vector<8xf32> to vector<8x1xf32>
    %165 = arith.addf %132, %164 : vector<8x1xf32>
    %c0_121 = arith.constant 0 : index
    %c0_122 = arith.constant 0 : index
    %c0_123 = arith.constant 0 : index
    %166 = vector.load %arg7[%c0_121, %c0_122, %c0_123] : memref<1x8x256xf32, #tpu.memory_space<vmem>>, vector<1x8x1xf32>
    %167 = vector.shape_cast %166 : vector<1x8x1xf32> to vector<8x1xf32>
    %168 = vector.shape_cast %161 : vector<8x1xf32> to vector<1x8x1xf32>
    tpu.vector_store %arg7[%c0_121, %c0_122, %c0_123], %168 {strides = array<i32>} : memref<1x8x256xf32, #tpu.memory_space<vmem>>, vector<1x8x1xf32>,
    %c0_124 = arith.constant 0 : index
    %c0_125 = arith.constant 0 : index
    %c128 = arith.constant 128 : index
    %169 = vector.load %arg7[%c0_124, %c0_125, %c128] : memref<1x8x256xf32, #tpu.memory_space<vmem>>, vector<1x8x1xf32>
    %170 = vector.shape_cast %169 : vector<1x8x1xf32> to vector<8x1xf32>
    %171 = vector.shape_cast %165 : vector<8x1xf32> to vector<1x8x1xf32>
    tpu.vector_store %arg7[%c0_124, %c0_125, %c128], %171 {strides = array<i32>} : memref<1x8x256xf32, #tpu.memory_space<vmem>>, vector<1x8x1xf32>,
    return
  }
  func.func @transform_0(%arg0: i32, %arg1: i32) -> (i32, i32, i32, i32) {
    %c0_i32 = arith.constant 0 : i32
    %c0_i32_0 = arith.constant 0 : i32
    %c0_i32_1 = arith.constant 0 : i32
    return %arg0, %arg1, %c0_i32, %c0_i32_0 : i32, i32, i32, i32
  }
  func.func @transform_1(%arg0: i32, %arg1: i32) -> (i32, i32, i32) {
    %c0_i32 = arith.constant 0 : i32
    %c0_i32_0 = arith.constant 0 : i32
    %c0_i32_1 = arith.constant 0 : i32
    %c0_i32_2 = arith.constant 0 : i32
    return %c0_i32, %c0_i32_0, %c0_i32_1 : i32, i32, i32
  }
  func.func @transform_2(%arg0: i32, %arg1: i32) -> (i32, i32) {
    %c0_i32 = arith.constant 0 : i32
    %c0_i32_0 = arith.constant 0 : i32
    %c0_i32_1 = arith.constant 0 : i32
    return %c0_i32, %c0_i32_0 : i32, i32
  }
  func.func @transform_3(%arg0: i32, %arg1: i32) -> (i32, i32) {
    %c0_i32 = arith.constant 0 : i32
    %c0_i32_0 = arith.constant 0 : i32
    %c0_i32_1 = arith.constant 0 : i32
    return %c0_i32, %c0_i32_0 : i32, i32
  }
  func.func @transform_4(%arg0: i32, %arg1: i32) -> (i32, i32, i32, i32, i32) {
    %c0_i32 = arith.constant 0 : i32
    %c0_i32_0 = arith.constant 0 : i32
    %c0_i32_1 = arith.constant 0 : i32
    %c0_i32_2 = arith.constant 0 : i32
    return %arg0, %arg1, %c0_i32, %c0_i32_0, %c0_i32_1 : i32, i32, i32, i32, i32
  }
  func.func @transform_5(%arg0: i32, %arg1: i32) -> (i32, i32, i32) {
    %c1_i32 = arith.constant 1 : i32
    %0 = arith.muli %arg0, %c1_i32 : i32
    %1 = arith.addi %0, %arg1 : i32
    %c0_i32 = arith.constant 0 : i32
    %c0_i32_0 = arith.constant 0 : i32
    %c0_i32_1 = arith.constant 0 : i32
    return %1, %c0_i32, %c0_i32_0 : i32, i32, i32
  }
}

</mosaic_0001>

<llo_original>
// kernel: tpu_custom_call.1
$region0: #{tpu_custom_call.1}
  #allocation0 [shape = 'u32[]', space=smem, size = 0x4, offset = 0x4, fixed_abs, tag = 'smem constant byte address 0x4 - core index']
  #allocation1 [shape = 'u32[72,128]{1,0:T(1,128)}', space=vmem, size = 0x9000, scoped, tag = 'internal scratch']
  %s0 = inlined_call_operand.vmem [shape: f32[2,1,8,512], index: 0, kind: input, shape index: {}]
  %s1 = inlined_call_operand.vmem [shape: f32[9,8,8], index: 1, kind: input, shape index: {}]
  %s2 = inlined_call_operand.vmem [shape: f32[8,1], index: 2, kind: input, shape index: {}]
  %s3 = inlined_call_operand.vmem [shape: s32[1,384], index: 3, kind: input, shape index: {}]
  %s4 = inlined_call_operand.hbm [shape: f32[2,1,4,8,384], index: 4, kind: output, shape index: {0}]
  %s5 = inlined_call_operand.hbm [shape: f32[2,8,256], index: 5, kind: output, shape index: {1}]
  %6 = xla_tuple %s4, %s5
  %s7 = sld [smem:[#allocation0]]
  $region57: #{tpu_custom_call.1} parent=0
    _
  %s9 = ssub.s32 1, %s7
  %s10 = scalar_select 0, %s9, %s7
  $region1: #{tpu_custom_call.1} parent=0
    #allocation2 [shape = 'u8[98304]{0}', space=vmem, size = 0x18000, scoped, tag = 'output window, operand 0']
    #allocation3 [shape = 's32[2]{0}', space=sflag, size = 0x8, scoped, tag = 'scoped memory for tpu_custom_call.1']
    #allocation4 [shape = 'u8[16384]{0}', space=vmem, size = 0x4000, scoped, tag = 'output window, operand 1']
    #allocation5 [shape = 's32[2]{0}', space=sflag, size = 0x8, scoped, tag = 'scoped memory for tpu_custom_call.1']
    %11 = vsyncpa [#allocation3], 0
    %s12 = scalar_lea.sflag [#allocation3], 1
    %13 = vsyncpa %s12, 0
    %14 = vsyncpa [#allocation5], 0
    %s15 = scalar_lea.sflag [#allocation5], 1
    %16 = vsyncpa %s15, 0
    loop: start=0, step=1, limit=4
    $region2: #{tpu_custom_call.1} parent=1 // loop_pre_header
      _
    $region3: #{tpu_custom_call.1} parent=1 // loop_header
      %s18 = sphi 0, %s22
      %p19 = scmp.ge.s32.totalorder %s18, 4
      %s25 = sphi 0, %s37
      %s26 = sphi 0, %s33
      %s27 = sphi 0, %s25
      %s28 = sphi 0, %s26
      %s29 = sphi 0, %s27
      %s30 = sphi 0, %s28
      %s42 = sphi 0, %s44
      %s45 = sphi 0, %s42
      %s46 = sphi 0, %s45
      %s62 = sphi 0, %s46
      %s66 = sphi 0, %s66
      %s68 = sphi 0, %s66
      %s69 = sphi 0, %s68
      %s83 = sphi 0, %s69
      %s87 = sphi 0, %s87
      %s89 = sphi 0, %s87
      %s90 = sphi 0, %s89
      %s104 = sphi 0, %s90
      %s108 = sphi 0, %s108
      %s110 = sphi 0, %s108
      %s111 = sphi 0, %s110
      %s125 = sphi 0, %s111
      %s133 = sphi 0, %s135
      %s136 = sphi 0, %s133
      %s137 = sphi 0, %s136
      %s153 = sphi 0, %s137
      %s161 = sphi 0, %s163
      %s164 = sphi 0, %s161
      %s165 = sphi 0, %s164
      %s181 = sphi 0, %s165
    $region4: #{tpu_custom_call.1} parent=1 // loop_header_branch
      %21 = sbr.rel (%p19) target = $region8
    $region5: #{tpu_custom_call.1} parent=1 // loop_body
      %s23 = ssub.s32 %s18, 1
      %s24 = ssub.s32 %s18, 2
      %s31 = sadd.s32 1, %s26
      %p32 = scmp.ge.s32.totalorder %s31, 1
      %s33 = scalar_select %p32, 0, %s31
      %s34 = sadd.s32 1, %s25
      %s35 = scalar_select %p32, %s34, %s25
      %p36 = scmp.ge.s32.totalorder %s35, 2
      %s37 = scalar_select %p36, 0, %s35
      %s38 = ssub.s32 %s25, %s37
      %s39 = ssub.s32 %s26, %s33
      %s40 = sor.u32 %s38, %s39
      %p41 = scmp.eq.s32.totalorder %s40, 0
      %s43 = sadd.s32 %s42, 1
      %s44 = scalar_select %p41, %s42, %s43
      %p47 = pneg %p41
      %p48 = scmp.eq.s32.totalorder %s18, 1
      %p49 = por %p47, %p48
      %p50 = scmp.ne.s32.totalorder %s42, %s45
      %p51 = scmp.eq.s32.totalorder %s18, 0
      %p52 = por %p50, %p51
      %p53 = scmp.ne.s32.totalorder %s42, %s45
      %p54 = scmp.eq.s32.totalorder %s23, 1
      %p55 = por %p53, %p54
      %p56 = scmp.ne.s32.totalorder %s45, %s46
      %p57 = scmp.eq.s32.totalorder %s23, 0
      %p58 = por %p56, %p57
      %p59 = scmp.ne.s32.totalorder %s45, %s46
      %p60 = scmp.eq.s32.totalorder %s24, 1
      %p61 = por %p59, %p60
      %p63 = scmp.ne.s32.totalorder %s46, %s62
      %p64 = scmp.eq.s32.totalorder %s24, 0
      %p65 = por %p63, %p64
      %s67 = sadd.s32 %s66, 1
      %p70 = scmp.eq.s32.totalorder %s18, 1
      %p71 = scmp.ne.s32.totalorder %s66, %s68
      %p72 = scmp.eq.s32.totalorder %s18, 0
      %p73 = por %p71, %p72
      %p74 = scmp.ne.s32.totalorder %s66, %s68
      %p75 = scmp.eq.s32.totalorder %s23, 1
      %p76 = por %p74, %p75
      %p77 = scmp.ne.s32.totalorder %s68, %s69
      %p78 = scmp.eq.s32.totalorder %s23, 0
      %p79 = por %p77, %p78
      %p80 = scmp.ne.s32.totalorder %s68, %s69
      %p81 = scmp.eq.s32.totalorder %s24, 1
      %p82 = por %p80, %p81
      %p84 = scmp.ne.s32.totalorder %s69, %s83
      %p85 = scmp.eq.s32.totalorder %s24, 0
      %p86 = por %p84, %p85
      %s88 = sadd.s32 %s87, 1
      %p91 = scmp.eq.s32.totalorder %s18, 1
      %p92 = scmp.ne.s32.totalorder %s87, %s89
      %p93 = scmp.eq.s32.totalorder %s18, 0
      %p94 = por %p92, %p93
      %p95 = scmp.ne.s32.totalorder %s87, %s89
      %p96 = scmp.eq.s32.totalorder %s23, 1
      %p97 = por %p95, %p96
      %p98 = scmp.ne.s32.totalorder %s89, %s90
      %p99 = scmp.eq.s32.totalorder %s23, 0
      %p100 = por %p98, %p99
      %p101 = scmp.ne.s32.totalorder %s89, %s90
      %p102 = scmp.eq.s32.totalorder %s24, 1
      %p103 = por %p101, %p102
      %p105 = scmp.ne.s32.totalorder %s90, %s104
      %p106 = scmp.eq.s32.totalorder %s24, 0
      %p107 = por %p105, %p106
      %s109 = sadd.s32 %s108, 1
      %p112 = scmp.eq.s32.totalorder %s18, 1
      %p113 = scmp.ne.s32.totalorder %s108, %s110
      %p114 = scmp.eq.s32.totalorder %s18, 0
      %p115 = por %p113, %p114
      %p116 = scmp.ne.s32.totalorder %s108, %s110
      %p117 = scmp.eq.s32.totalorder %s23, 1
      %p118 = por %p116, %p117
      %p119 = scmp.ne.s32.totalorder %s110, %s111
      %p120 = scmp.eq.s32.totalorder %s23, 0
      %p121 = por %p119, %p120
      %p122 = scmp.ne.s32.totalorder %s110, %s111
      %p123 = scmp.eq.s32.totalorder %s24, 1
      %p124 = por %p122, %p123
      %p126 = scmp.ne.s32.totalorder %s111, %s125
      %p127 = scmp.eq.s32.totalorder %s24, 0
      %p128 = por %p126, %p127
      %s129 = ssub.s32 %s25, %s37
      %s130 = ssub.s32 %s26, %s33
      %s131 = sor.u32 %s129, %s130
      %p132 = scmp.eq.s32.totalorder %s131, 0
      %s134 = sadd.s32 %s133, 1
      %s135 = scalar_select %p132, %s133, %s134
      %p138 = pneg %p132
      %p139 = scmp.eq.s32.totalorder %s18, 1
      %p140 = por %p138, %p139
      %p141 = scmp.ne.s32.totalorder %s133, %s136
      %p142 = scmp.eq.s32.totalorder %s18, 0
      %p143 = por %p141, %p142
      %p144 = scmp.ne.s32.totalorder %s133, %s136
      %p145 = scmp.eq.s32.totalorder %s23, 1
      %p146 = por %p144, %p145
      %p147 = scmp.ne.s32.totalorder %s136, %s137
      %p148 = scmp.eq.s32.totalorder %s23, 0
      %p149 = por %p147, %p148
      %p150 = scmp.ne.s32.totalorder %s136, %s137
      %p151 = scmp.eq.s32.totalorder %s24, 1
      %p152 = por %p150, %p151
      %p154 = scmp.ne.s32.totalorder %s137, %s153
      %p155 = scmp.eq.s32.totalorder %s24, 0
      %p156 = por %p154, %p155
      %s157 = sadd.s32 %s25, %s26
      %s158 = sadd.s32 %s37, %s33
      %s159 = ssub.s32 %s157, %s158
      %p160 = scmp.eq.s32.totalorder %s159, 0
      %s162 = sadd.s32 %s161, 1
      %s163 = scalar_select %p160, %s161, %s162
      %p166 = pneg %p160
      %p167 = scmp.eq.s32.totalorder %s18, 1
      %p168 = por %p166, %p167
      %p169 = scmp.ne.s32.totalorder %s161, %s164
      %p170 = scmp.eq.s32.totalorder %s18, 0
      %p171 = por %p169, %p170
      %p172 = scmp.ne.s32.totalorder %s161, %s164
      %p173 = scmp.eq.s32.totalorder %s23, 1
      %p174 = por %p172, %p173
      %p175 = scmp.ne.s32.totalorder %s164, %s165
      %p176 = scmp.eq.s32.totalorder %s23, 0
      %p177 = por %p175, %p176
      %p178 = scmp.ne.s32.totalorder %s164, %s165
      %p179 = scmp.eq.s32.totalorder %s24, 1
      %p180 = por %p178, %p179
      %p182 = scmp.ne.s32.totalorder %s165, %s181
      %p183 = scmp.eq.s32.totalorder %s24, 0
      %p184 = por %p182, %p183
      %p185 = scmp.le.s32.totalorder 1, %s18
      %p186 = scmp.lt.s32.totalorder %s18, 3
      %p187 = pnand %p185, %p186
      %p188 = pneg %p187
      // Predicated region
      $region9: #{tpu_custom_call.1} parent=5 // pred_check
        _
      $region10: #{tpu_custom_call.1} parent=5 // pred_check_branch
        %190 = sbr.rel (%p187) target = $region12
      $region11: #{tpu_custom_call.1} parent=5 // pred_region
        %s191 = ssub.s32 %s18, 1
        // Predicated region
        $region13: #{tpu_custom_call.1} parent=11 // pred_check
          %p192 = pneg %p79
        $region14: #{tpu_custom_call.1} parent=11 // pred_check_branch
          %194 = sbr.rel (%p192) target = $region16
        $region15: #{tpu_custom_call.1} parent=11 // pred_region
          _
        $region16: #{tpu_custom_call.1} parent=11 // pred_fallthru
          _
        // Predicated region
        $region17: #{tpu_custom_call.1} parent=11 // pred_check
          %p195 = pneg %p100
        $region18: #{tpu_custom_call.1} parent=11 // pred_check_branch
          %197 = sbr.rel (%p195) target = $region20
        $region19: #{tpu_custom_call.1} parent=11 // pred_region
          _
        $region20: #{tpu_custom_call.1} parent=11 // pred_fallthru
          _
        // Predicated region
        $region21: #{tpu_custom_call.1} parent=11 // pred_check
          %p198 = pneg %p121
        $region22: #{tpu_custom_call.1} parent=11 // pred_check_branch
          %200 = sbr.rel (%p198) target = $region24
        $region23: #{tpu_custom_call.1} parent=11 // pred_region
          _
        $region24: #{tpu_custom_call.1} parent=11 // pred_fallthru
          _
      $region12: #{tpu_custom_call.1} parent=5 // pred_fallthru
        _
      %p201 = scmp.lt.s32.totalorder %s18, 2
      // Predicated region
      $region25: #{tpu_custom_call.1} parent=5 // pred_check
        %p202 = pneg %p201
      $region26: #{tpu_custom_call.1} parent=5 // pred_check_branch
        %204 = sbr.rel (%p202) target = $region28
      $region27: #{tpu_custom_call.1} parent=5 // pred_region
        // Predicated region
        $region29: #{tpu_custom_call.1} parent=27 // pred_check
          %p205 = pneg %p52
        $region30: #{tpu_custom_call.1} parent=27 // pred_check_branch
          %207 = sbr.rel (%p205) target = $region32
        $region31: #{tpu_custom_call.1} parent=27 // pred_region
          %p208 = scmp.lt.s32.totalorder %s25, 1
          %s209 = scalar_select %p208, %s25, 1
          %p210 = scmp.lt.s32.totalorder %s26, 0
          %s211 = scalar_select %p210, %s26, 0
          %s212 = smul.addr %s211, 4
          %s213 = smul.addr %s209, 4
          %s214 = sadd.s32 %s212, %s213
          %s215 = smul.addr %s214, 8
          %s216 = scalar_lea.vmem %s0, %s215
        $region32: #{tpu_custom_call.1} parent=27 // pred_fallthru
          _
      $region28: #{tpu_custom_call.1} parent=5 // pred_fallthru
        _
      %p217 = scmp.le.s32.totalorder 1, %s18
      %p218 = scmp.lt.s32.totalorder %s18, 3
      %p219 = pnand %p217, %p218
      %p220 = pneg %p219
      // Predicated region
      $region33: #{tpu_custom_call.1} parent=5 // pred_check
        _
      $region34: #{tpu_custom_call.1} parent=5 // pred_check_branch
        %222 = sbr.rel (%p219) target = $region36
      $region35: #{tpu_custom_call.1} parent=5 // pred_region
        %s223 = ssub.s32 %s18, 1
        %p224 = scmp.lt.s32.totalorder %s27, 1
        %s225 = scalar_select %p224, %s27, 1
        %p226 = scmp.lt.s32.totalorder %s28, 0
        %s227 = scalar_select %p226, %s28, 0
        %s228 = smul.addr %s227, 4
        %s229 = smul.addr %s225, 4
        %s230 = sadd.s32 %s228, %s229
        %s231 = smul.addr %s230, 8
        %s232 = scalar_lea.vmem %s0, %s231
        %p233 = pneg %p58
        %p234 = pneg %p55
        %p235 = pneg %p79
        %p236 = pneg %p76
        %p237 = pneg %p100
        %p238 = pneg %p97
        %p239 = pneg %p121
        %p240 = pneg %p118
        %p241 = pneg %p149
        %p242 = pneg %p146
        %s243 = sand.u32 %s136, 1
        %s244 = scalar_lea.sflag [#allocation3], %s243
        %s245 = sand.u32 %s136, 1
        %s246 = smul.addr %s245, 96
        %s247 = scalar_lea.vmem [#allocation2], %s246
        %p248 = pneg %p177
        %p249 = pneg %p174
        %s250 = sand.u32 %s164, 1
        %s251 = scalar_lea.sflag [#allocation5], %s250
        %s252 = sand.u32 %s164, 1
        %s253 = smul.addr %s252, 16
        %s254 = scalar_lea.vmem [#allocation4], %s253
        %p255 = scmp.lt.s32.totalorder %s27, 1
        %s256 = scalar_select %p255, %s27, 1
        %p257 = scmp.lt.s32.totalorder %s28, 0
        %s258 = scalar_select %p257, %s28, 0
        %s259 = smul.addr %s258, 4
        %s260 = smul.addr %s256, 4
        %s261 = sadd.s32 %s259, %s260
        %s262 = smul.addr %s261, 8
        %s263 = scalar_lea.vmem %s0, %s262
        %s264 = sadd.s32 %s27, %s28
        %v265 = vlaneseq
        %v266 = vand.u32 %v265, 127
        %v267 = vadd.s32 %v266, 128
        %v268 = vadd.s32 %v266, 256
        %v269 = vld [vmem:[%s3] sm:$0x7]
        %v270 = vld [vmem:[%s263] sm:$0xff]
        %v271 = vld [vmem:[%s263 + $0x8] sm:$0xff]
        %v272 = vld [vmem:[%s263 + $0x10] sm:$0xff]
        %v273 = vld [vmem:[%s263 + $0x18] sm:$0xff]
        %v274 = vld [vmem:[%s1] sm:$0xff]
        %s275 = scalar_lea.vmem %s1, 8
        %v276 = vld [vmem:[%s275] sm:$0xff]
        %281 = vrot.lane.b32.xlu0 %v270, 111
        %v282 = vpop.permute.xlu0 %281
        %283 = vrot.lane.b32.xlu0 %v271, 111
        %v284 = vpop.permute.xlu0 %283
        %285 = vrot.lane.b32.xlu0 %v272, 111
        %v286 = vpop.permute.xlu0 %285
        %287 = vrot.lane.b32.xlu0 %v273, 111
        %v288 = vpop.permute.xlu0 %287
        %vm289 = vcmask 908288
        %v290 = vsel %vm289, %v282, %v284
        %v291 = vsel %vm289, %v284, %v286
        %v292 = vsel %vm289, %v286, %v288
        %vm296 = vcmask 64512
        %v298 = vsel %vm296, %v276, 0
        %300 = vmatpush.msra.mxu0 0.0
        %301 = vmatpush.msra.mxu0 0.0
        %302 = vmatpush.msra.mxu0 0.0
        %303 = vmatpush.msra.mxu0 0.0
        %304 = vmatpush.msra.mxu0 0.0
        %305 = vmatpush.msra.mxu0 0.0
        %306 = vmatpush.msra.mxu0 0.0
        %307 = vmatpush.msra.mxu0 0.0
        %308 = vmatpush.msra.mxu0 0.0
        %309 = vmatpush.msra.mxu0 0.0
        %310 = vmatpush.msra.mxu0 0.0
        %311 = vmatpush.msra.mxu0 0.0
        %312 = vmatpush.msra.mxu0 0.0
        %313 = vmatpush.msra.mxu0 0.0
        %314 = vmatpush.msra.mxu0 0.0
        %315 = vmatpush.msra.mxu0 %v290
        %316 = vmatmul.f32.gmra.mxu0 %v298
        %v317 = vpop.f32.mrf.mxu0
        %v318 = vadd.f32 0.0, %v317
        %319 = vdwg.mxu0
        %320 = vmatpush.msra.mxu0 0.0
        %321 = vmatpush.msra.mxu0 0.0
        %322 = vmatpush.msra.mxu0 0.0
        %323 = vmatpush.msra.mxu0 0.0
        %324 = vmatpush.msra.mxu0 0.0
        %325 = vmatpush.msra.mxu0 0.0
        %326 = vmatpush.msra.mxu0 0.0
        %327 = vmatpush.msra.mxu0 0.0
        %328 = vmatpush.msra.mxu0 0.0
        %329 = vmatpush.msra.mxu0 0.0
        %330 = vmatpush.msra.mxu0 0.0
        %331 = vmatpush.msra.mxu0 0.0
        %332 = vmatpush.msra.mxu0 0.0
        %333 = vmatpush.msra.mxu0 0.0
        %334 = vmatpush.msra.mxu0 0.0
        %335 = vmatpush.msra.mxu0 %v291
        %336 = vmatmul.f32.gmra.mxu0 %v298
        %v337 = vpop.f32.mrf.mxu0
        %v338 = vadd.f32 0.0, %v337
        %339 = vdwg.mxu0
        %340 = vmatpush.msra.mxu0 0.0
        %341 = vmatpush.msra.mxu0 0.0
        %342 = vmatpush.msra.mxu0 0.0
        %343 = vmatpush.msra.mxu0 0.0
        %344 = vmatpush.msra.mxu0 0.0
        %345 = vmatpush.msra.mxu0 0.0
        %346 = vmatpush.msra.mxu0 0.0
        %347 = vmatpush.msra.mxu0 0.0
        %348 = vmatpush.msra.mxu0 0.0
        %349 = vmatpush.msra.mxu0 0.0
        %350 = vmatpush.msra.mxu0 0.0
        %351 = vmatpush.msra.mxu0 0.0
        %352 = vmatpush.msra.mxu0 0.0
        %353 = vmatpush.msra.mxu0 0.0
        %354 = vmatpush.msra.mxu0 0.0
        %355 = vmatpush.msra.mxu0 %v292
        %356 = vmatmul.f32.gmra.mxu0 %v298
        %v357 = vpop.f32.mrf.mxu0
        %v358 = vadd.f32 0.0, %v357
        %359 = vdwg.mxu0
        %360 = vrot.lane.b32.xlu0 %v270, 110
        %v361 = vpop.permute.xlu0 %360
        %362 = vrot.lane.b32.xlu0 %v271, 110
        %v363 = vpop.permute.xlu0 %362
        %364 = vrot.lane.b32.xlu0 %v272, 110
        %v365 = vpop.permute.xlu0 %364
        %366 = vrot.lane.b32.xlu0 %v273, 110
        %v367 = vpop.permute.xlu0 %366
        %vm368 = vcmask 900096
        %v369 = vsel %vm368, %v361, %v363
        %v370 = vsel %vm368, %v363, %v365
        %v371 = vsel %vm368, %v365, %v367
        %v376 = vsel %vm296, %v274, 0
        %378 = vmatpush.msra.mxu0 0.0
        %379 = vmatpush.msra.mxu0 0.0
        %380 = vmatpush.msra.mxu0 0.0
        %381 = vmatpush.msra.mxu0 0.0
        %382 = vmatpush.msra.mxu0 0.0
        %383 = vmatpush.msra.mxu0 0.0
        %384 = vmatpush.msra.mxu0 0.0
        %385 = vmatpush.msra.mxu0 0.0
        %386 = vmatpush.msra.mxu0 0.0
        %387 = vmatpush.msra.mxu0 0.0
        %388 = vmatpush.msra.mxu0 0.0
        %389 = vmatpush.msra.mxu0 0.0
        %390 = vmatpush.msra.mxu0 0.0
        %391 = vmatpush.msra.mxu0 0.0
        %392 = vmatpush.msra.mxu0 0.0
        %393 = vmatpush.msra.mxu0 %v369
        %394 = vmatmul.f32.gmra.mxu0 %v376
        %v395 = vpop.f32.mrf.mxu0
        %v396 = vadd.f32 %v318, %v395
        %397 = vdwg.mxu0
        %398 = vmatpush.msra.mxu0 0.0
        %399 = vmatpush.msra.mxu0 0.0
        %400 = vmatpush.msra.mxu0 0.0
        %401 = vmatpush.msra.mxu0 0.0
        %402 = vmatpush.msra.mxu0 0.0
        %403 = vmatpush.msra.mxu0 0.0
        %404 = vmatpush.msra.mxu0 0.0
        %405 = vmatpush.msra.mxu0 0.0
        %406 = vmatpush.msra.mxu0 0.0
        %407 = vmatpush.msra.mxu0 0.0
        %408 = vmatpush.msra.mxu0 0.0
        %409 = vmatpush.msra.mxu0 0.0
        %410 = vmatpush.msra.mxu0 0.0
        %411 = vmatpush.msra.mxu0 0.0
        %412 = vmatpush.msra.mxu0 0.0
        %413 = vmatpush.msra.mxu0 %v370
        %414 = vmatmul.f32.gmra.mxu0 %v376
        %v415 = vpop.f32.mrf.mxu0
        %v416 = vadd.f32 %v338, %v415
        %417 = vdwg.mxu0
        %418 = vmatpush.msra.mxu0 0.0
        %419 = vmatpush.msra.mxu0 0.0
        %420 = vmatpush.msra.mxu0 0.0
        %421 = vmatpush.msra.mxu0 0.0
        %422 = vmatpush.msra.mxu0 0.0
        %423 = vmatpush.msra.mxu0 0.0
        %424 = vmatpush.msra.mxu0 0.0
        %425 = vmatpush.msra.mxu0 0.0
        %426 = vmatpush.msra.mxu0 0.0
        %427 = vmatpush.msra.mxu0 0.0
        %428 = vmatpush.msra.mxu0 0.0
        %429 = vmatpush.msra.mxu0 0.0
        %430 = vmatpush.msra.mxu0 0.0
        %431 = vmatpush.msra.mxu0 0.0
        %432 = vmatpush.msra.mxu0 0.0
        %433 = vmatpush.msra.mxu0 %v371
        %434 = vmatmul.f32.gmra.mxu0 %v376
        %v435 = vpop.f32.mrf.mxu0
        %v436 = vadd.f32 %v358, %v435
        %437 = vdwg.mxu0
        %s438 = scalar_lea.vmem %s1, 16
        %v439 = vld [vmem:[%s438] sm:$0xff]
        %440 = vrot.lane.b32.xlu0 %v270, 127
        %v441 = vpop.permute.xlu0 %440
        %442 = vrot.lane.b32.xlu0 %v271, 127
        %v443 = vpop.permute.xlu0 %442
        %444 = vrot.lane.b32.xlu0 %v272, 127
        %v445 = vpop.permute.xlu0 %444
        %446 = vrot.lane.b32.xlu0 %v273, 127
        %v447 = vpop.permute.xlu0 %446
        %vm448 = vcmask 1039360
        %v449 = vsel %vm448, %v441, %v443
        %v450 = vsel %vm448, %v443, %v445
        %v451 = vsel %vm448, %v445, %v447
        %v456 = vsel %vm296, %v439, 0
        %458 = vmatpush.msra.mxu0 0.0
        %459 = vmatpush.msra.mxu0 0.0
        %460 = vmatpush.msra.mxu0 0.0
        %461 = vmatpush.msra.mxu0 0.0
        %462 = vmatpush.msra.mxu0 0.0
        %463 = vmatpush.msra.mxu0 0.0
        %464 = vmatpush.msra.mxu0 0.0
        %465 = vmatpush.msra.mxu0 0.0
        %466 = vmatpush.msra.mxu0 0.0
        %467 = vmatpush.msra.mxu0 0.0
        %468 = vmatpush.msra.mxu0 0.0
        %469 = vmatpush.msra.mxu0 0.0
        %470 = vmatpush.msra.mxu0 0.0
        %471 = vmatpush.msra.mxu0 0.0
        %472 = vmatpush.msra.mxu0 0.0
        %473 = vmatpush.msra.mxu0 %v449
        %474 = vmatmul.f32.gmra.mxu0 %v456
        %v475 = vpop.f32.mrf.mxu0
        %v476 = vadd.f32 0.0, %v475
        %477 = vdwg.mxu0
        %478 = vmatpush.msra.mxu0 0.0
        %479 = vmatpush.msra.mxu0 0.0
        %480 = vmatpush.msra.mxu0 0.0
        %481 = vmatpush.msra.mxu0 0.0
        %482 = vmatpush.msra.mxu0 0.0
        %483 = vmatpush.msra.mxu0 0.0
        %484 = vmatpush.msra.mxu0 0.0
        %485 = vmatpush.msra.mxu0 0.0
        %486 = vmatpush.msra.mxu0 0.0
        %487 = vmatpush.msra.mxu0 0.0
        %488 = vmatpush.msra.mxu0 0.0
        %489 = vmatpush.msra.mxu0 0.0
        %490 = vmatpush.msra.mxu0 0.0
        %491 = vmatpush.msra.mxu0 0.0
        %492 = vmatpush.msra.mxu0 0.0
        %493 = vmatpush.msra.mxu0 %v450
        %494 = vmatmul.f32.gmra.mxu0 %v456
        %v495 = vpop.f32.mrf.mxu0
        %v496 = vadd.f32 0.0, %v495
        %497 = vdwg.mxu0
        %498 = vmatpush.msra.mxu0 0.0
        %499 = vmatpush.msra.mxu0 0.0
        %500 = vmatpush.msra.mxu0 0.0
        %501 = vmatpush.msra.mxu0 0.0
        %502 = vmatpush.msra.mxu0 0.0
        %503 = vmatpush.msra.mxu0 0.0
        %504 = vmatpush.msra.mxu0 0.0
        %505 = vmatpush.msra.mxu0 0.0
        %506 = vmatpush.msra.mxu0 0.0
        %507 = vmatpush.msra.mxu0 0.0
        %508 = vmatpush.msra.mxu0 0.0
        %509 = vmatpush.msra.mxu0 0.0
        %510 = vmatpush.msra.mxu0 0.0
        %511 = vmatpush.msra.mxu0 0.0
        %512 = vmatpush.msra.mxu0 0.0
        %513 = vmatpush.msra.mxu0 %v451
        %514 = vmatmul.f32.gmra.mxu0 %v456
        %v515 = vpop.f32.mrf.mxu0
        %v516 = vadd.f32 0.0, %v515
        %517 = vdwg.mxu0
        %v518 = vadd.f32 %v396, %v476
        %v519 = vadd.f32 %v416, %v496
        %v520 = vadd.f32 %v436, %v516
        %v521 = vld [vmem:[%s263] sm:$0xff]
        %v522 = vld [vmem:[%s263 + $0x8] sm:$0xff]
        %v523 = vld [vmem:[%s263 + $0x10] sm:$0xff]
        %s524 = scalar_lea.vmem %s1, 24
        %v525 = vld [vmem:[%s524] sm:$0xff]
        %v527 = vsel %vm296, %v525, 0
        %529 = vmatpush.msra.mxu0 0.0
        %530 = vmatpush.msra.mxu0 0.0
        %531 = vmatpush.msra.mxu0 0.0
        %532 = vmatpush.msra.mxu0 0.0
        %533 = vmatpush.msra.mxu0 0.0
        %534 = vmatpush.msra.mxu0 0.0
        %535 = vmatpush.msra.mxu0 0.0
        %536 = vmatpush.msra.mxu0 0.0
        %537 = vmatpush.msra.mxu0 0.0
        %538 = vmatpush.msra.mxu0 0.0
        %539 = vmatpush.msra.mxu0 0.0
        %540 = vmatpush.msra.mxu0 0.0
        %541 = vmatpush.msra.mxu0 0.0
        %542 = vmatpush.msra.mxu0 0.0
        %543 = vmatpush.msra.mxu0 0.0
        %544 = vmatpush.msra.mxu0 %v521
        %545 = vmatmul.f32.gmra.mxu0 %v527
        %v546 = vpop.f32.mrf.mxu0
        %v547 = vadd.f32 0.0, %v546
        %548 = vdwg.mxu0
        %549 = vmatpush.msra.mxu0 0.0
        %550 = vmatpush.msra.mxu0 0.0
        %551 = vmatpush.msra.mxu0 0.0
        %552 = vmatpush.msra.mxu0 0.0
        %553 = vmatpush.msra.mxu0 0.0
        %554 = vmatpush.msra.mxu0 0.0
        %555 = vmatpush.msra.mxu0 0.0
        %556 = vmatpush.msra.mxu0 0.0
        %557 = vmatpush.msra.mxu0 0.0
        %558 = vmatpush.msra.mxu0 0.0
        %559 = vmatpush.msra.mxu0 0.0
        %560 = vmatpush.msra.mxu0 0.0
        %561 = vmatpush.msra.mxu0 0.0
        %562 = vmatpush.msra.mxu0 0.0
        %563 = vmatpush.msra.mxu0 0.0
        %564 = vmatpush.msra.mxu0 %v522
        %565 = vmatmul.f32.gmra.mxu0 %v527
        %v566 = vpop.f32.mrf.mxu0
        %v567 = vadd.f32 0.0, %v566
        %568 = vdwg.mxu0
        %569 = vmatpush.msra.mxu0 0.0
        %570 = vmatpush.msra.mxu0 0.0
        %571 = vmatpush.msra.mxu0 0.0
        %572 = vmatpush.msra.mxu0 0.0
        %573 = vmatpush.msra.mxu0 0.0
        %574 = vmatpush.msra.mxu0 0.0
        %575 = vmatpush.msra.mxu0 0.0
        %576 = vmatpush.msra.mxu0 0.0
        %577 = vmatpush.msra.mxu0 0.0
        %578 = vmatpush.msra.mxu0 0.0
        %579 = vmatpush.msra.mxu0 0.0
        %580 = vmatpush.msra.mxu0 0.0
        %581 = vmatpush.msra.mxu0 0.0
        %582 = vmatpush.msra.mxu0 0.0
        %583 = vmatpush.msra.mxu0 0.0
        %584 = vmatpush.msra.mxu0 %v523
        %585 = vmatmul.f32.gmra.mxu0 %v527
        %v586 = vpop.f32.mrf.mxu0
        %v587 = vadd.f32 0.0, %v586
        %588 = vdwg.mxu0
        %v589 = vadd.f32 %v518, %v547
        %v590 = vadd.f32 %v519, %v567
        %v591 = vadd.f32 %v520, %v587
        %v592 = vld [vmem:[%s2] sm:$0xff]
        %594 = vset.pattern.permute.xlu0 0
        %595 = vperm.xlu0 %594, %v592
        %v596 = vpop.permute.xlu0 %595
        %v598 = vadd.f32 %v589, %v596
        %v599 = vadd.f32 %v590, %v596
        %v600 = vadd.f32 %v591, %v596
        %601 = vst [vmem:[%s247] sm:$0xff] %v598
        %602 = vst [vmem:[%s247 + $0x8] sm:$0xff] %v599
        %603 = vst [vmem:[%s247 + $0x10] sm:$0xff] %v600
        %s604 = smul.u32 %s28, 16
        %s605 = ssub.s32 15, %s604
        %p606 = scmp.lt.s32.totalorder %s605, 16
        %s607 = scalar_select %p606, %s605, 16
        %vm608 = vcmp.lt.s32.totalorder %v269, 15
        %s609 = smul.u32 %s607, 17
        %v610 = vstv %s609
        %vm611 = vcmp.lt.s32.totalorder %v266, %v610
        %vm612 = vcmp.lt.s32.totalorder %v267, %v610
        %vm613 = vcmp.lt.s32.totalorder %v268, %v610
        %v614 = vsel %vm611, 1, 0
        %v615 = vsel %vm612, 1, 0
        %v616 = vsel %vm613, 1, 0
        %v617 = vrot.slane %v615, 7
        %v618 = vrot.slane %v616, 6
        %vm619 = vcmask 1040384
        %v620 = vsel %vm619, %v614, %v617
        %vm621 = vcmask 1041408
        %v622 = vsel %vm621, %v620, %v618
        %vm623 = vcmp.ne.s32.totalorder %v622, 0
        %vm624 = vmand %vm608, %vm623
        %v625 = vsel %vm624, 1, 0
        %v626 = vcvt.s32.f32 %v625
        %v628 = vperm.slane %v626, 0
        %v629 = vperm.slane %v626, 1
        %v630 = vperm.slane %v626, 2
        %v634 = vmul.f32 %v598, %v628
        %v635 = vmul.f32 %v599, %v629
        %v636 = vmul.f32 %v600, %v630
        %v637 = vadd.f32 %v634, %v635
        %v638 = vadd.f32 %v637, %v636
        %639 = vadd.xlane.f32.xlu0 %v638
        %v640 = vpop.xlane.xlu0 %639
        %v641 = vadd.f32 %v640, 0.0
        %v642 = vmul.f32 %v634, %v598
        %v643 = vmul.f32 %v635, %v599
        %v644 = vmul.f32 %v636, %v600
        %v645 = vadd.f32 %v642, %v643
        %v646 = vadd.f32 %v645, %v644
        %647 = vadd.xlane.f32.xlu0 %v646
        %v648 = vpop.xlane.xlu0 %647
        %v649 = vadd.f32 %v648, 0.0
        %v650 = vld [vmem:[%s263] sm:$0xff]
        %v651 = vld [vmem:[%s263 + $0x8] sm:$0xff]
        %v652 = vld [vmem:[%s263 + $0x10] sm:$0xff]
        %v653 = vld [vmem:[%s263 + $0x18] sm:$0xff]
        %s654 = scalar_lea.vmem %s1, 32
        %v655 = vld [vmem:[%s654] sm:$0xff]
        %v656 = vld [vmem:[%s263] sm:$0xff]
        %v657 = vld [vmem:[%s263 + $0x8] sm:$0xff]
        %v658 = vld [vmem:[%s263 + $0x10] sm:$0xff]
        %s659 = scalar_lea.vmem %s1, 40
        %v660 = vld [vmem:[%s659] sm:$0xff]
        %v662 = vsel %vm296, %v660, 0
        %664 = vmatpush.msra.mxu0 0.0
        %665 = vmatpush.msra.mxu0 0.0
        %666 = vmatpush.msra.mxu0 0.0
        %667 = vmatpush.msra.mxu0 0.0
        %668 = vmatpush.msra.mxu0 0.0
        %669 = vmatpush.msra.mxu0 0.0
        %670 = vmatpush.msra.mxu0 0.0
        %671 = vmatpush.msra.mxu0 0.0
        %672 = vmatpush.msra.mxu0 0.0
        %673 = vmatpush.msra.mxu0 0.0
        %674 = vmatpush.msra.mxu0 0.0
        %675 = vmatpush.msra.mxu0 0.0
        %676 = vmatpush.msra.mxu0 0.0
        %677 = vmatpush.msra.mxu0 0.0
        %678 = vmatpush.msra.mxu0 0.0
        %679 = vmatpush.msra.mxu0 %v656
        %680 = vmatmul.f32.gmra.mxu0 %v662
        %v681 = vpop.f32.mrf.mxu0
        %v682 = vadd.f32 0.0, %v681
        %683 = vdwg.mxu0
        %684 = vmatpush.msra.mxu0 0.0
        %685 = vmatpush.msra.mxu0 0.0
        %686 = vmatpush.msra.mxu0 0.0
        %687 = vmatpush.msra.mxu0 0.0
        %688 = vmatpush.msra.mxu0 0.0
        %689 = vmatpush.msra.mxu0 0.0
        %690 = vmatpush.msra.mxu0 0.0
        %691 = vmatpush.msra.mxu0 0.0
        %692 = vmatpush.msra.mxu0 0.0
        %693 = vmatpush.msra.mxu0 0.0
        %694 = vmatpush.msra.mxu0 0.0
        %695 = vmatpush.msra.mxu0 0.0
        %696 = vmatpush.msra.mxu0 0.0
        %697 = vmatpush.msra.mxu0 0.0
        %698 = vmatpush.msra.mxu0 0.0
        %699 = vmatpush.msra.mxu0 %v657
        %700 = vmatmul.f32.gmra.mxu0 %v662
        %v701 = vpop.f32.mrf.mxu0
        %v702 = vadd.f32 0.0, %v701
        %703 = vdwg.mxu0
        %704 = vmatpush.msra.mxu0 0.0
        %705 = vmatpush.msra.mxu0 0.0
        %706 = vmatpush.msra.mxu0 0.0
        %707 = vmatpush.msra.mxu0 0.0
        %708 = vmatpush.msra.mxu0 0.0
        %709 = vmatpush.msra.mxu0 0.0
        %710 = vmatpush.msra.mxu0 0.0
        %711 = vmatpush.msra.mxu0 0.0
        %712 = vmatpush.msra.mxu0 0.0
        %713 = vmatpush.msra.mxu0 0.0
        %714 = vmatpush.msra.mxu0 0.0
        %715 = vmatpush.msra.mxu0 0.0
        %716 = vmatpush.msra.mxu0 0.0
        %717 = vmatpush.msra.mxu0 0.0
        %718 = vmatpush.msra.mxu0 0.0
        %719 = vmatpush.msra.mxu0 %v658
        %720 = vmatmul.f32.gmra.mxu0 %v662
        %v721 = vpop.f32.mrf.mxu0
        %v722 = vadd.f32 0.0, %v721
        %723 = vdwg.mxu0
        %728 = vrot.lane.b32.xlu0 %v650, 111
        %v729 = vpop.permute.xlu0 %728
        %730 = vrot.lane.b32.xlu0 %v651, 111
        %v731 = vpop.permute.xlu0 %730
        %732 = vrot.lane.b32.xlu0 %v652, 111
        %v733 = vpop.permute.xlu0 %732
        %734 = vrot.lane.b32.xlu0 %v653, 111
        %v735 = vpop.permute.xlu0 %734
        %v736 = vsel %vm289, %v729, %v731
        %v737 = vsel %vm289, %v731, %v733
        %v738 = vsel %vm289, %v733, %v735
        %v743 = vsel %vm296, %v655, 0
        %745 = vmatpush.msra.mxu0 0.0
        %746 = vmatpush.msra.mxu0 0.0
        %747 = vmatpush.msra.mxu0 0.0
        %748 = vmatpush.msra.mxu0 0.0
        %749 = vmatpush.msra.mxu0 0.0
        %750 = vmatpush.msra.mxu0 0.0
        %751 = vmatpush.msra.mxu0 0.0
        %752 = vmatpush.msra.mxu0 0.0
        %753 = vmatpush.msra.mxu0 0.0
        %754 = vmatpush.msra.mxu0 0.0
        %755 = vmatpush.msra.mxu0 0.0
        %756 = vmatpush.msra.mxu0 0.0
        %757 = vmatpush.msra.mxu0 0.0
        %758 = vmatpush.msra.mxu0 0.0
        %759 = vmatpush.msra.mxu0 0.0
        %760 = vmatpush.msra.mxu0 %v736
        %761 = vmatmul.f32.gmra.mxu0 %v743
        %v762 = vpop.f32.mrf.mxu0
        %v763 = vadd.f32 %v682, %v762
        %764 = vdwg.mxu0
        %765 = vmatpush.msra.mxu0 0.0
        %766 = vmatpush.msra.mxu0 0.0
        %767 = vmatpush.msra.mxu0 0.0
        %768 = vmatpush.msra.mxu0 0.0
        %769 = vmatpush.msra.mxu0 0.0
        %770 = vmatpush.msra.mxu0 0.0
        %771 = vmatpush.msra.mxu0 0.0
        %772 = vmatpush.msra.mxu0 0.0
        %773 = vmatpush.msra.mxu0 0.0
        %774 = vmatpush.msra.mxu0 0.0
        %775 = vmatpush.msra.mxu0 0.0
        %776 = vmatpush.msra.mxu0 0.0
        %777 = vmatpush.msra.mxu0 0.0
        %778 = vmatpush.msra.mxu0 0.0
        %779 = vmatpush.msra.mxu0 0.0
        %780 = vmatpush.msra.mxu0 %v737
        %781 = vmatmul.f32.gmra.mxu0 %v743
        %v782 = vpop.f32.mrf.mxu0
        %v783 = vadd.f32 %v702, %v782
        %784 = vdwg.mxu0
        %785 = vmatpush.msra.mxu0 0.0
        %786 = vmatpush.msra.mxu0 0.0
        %787 = vmatpush.msra.mxu0 0.0
        %788 = vmatpush.msra.mxu0 0.0
        %789 = vmatpush.msra.mxu0 0.0
        %790 = vmatpush.msra.mxu0 0.0
        %791 = vmatpush.msra.mxu0 0.0
        %792 = vmatpush.msra.mxu0 0.0
        %793 = vmatpush.msra.mxu0 0.0
        %794 = vmatpush.msra.mxu0 0.0
        %795 = vmatpush.msra.mxu0 0.0
        %796 = vmatpush.msra.mxu0 0.0
        %797 = vmatpush.msra.mxu0 0.0
        %798 = vmatpush.msra.mxu0 0.0
        %799 = vmatpush.msra.mxu0 0.0
        %800 = vmatpush.msra.mxu0 %v738
        %801 = vmatmul.f32.gmra.mxu0 %v743
        %v802 = vpop.f32.mrf.mxu0
        %v803 = vadd.f32 %v722, %v802
        %804 = vdwg.mxu0
        %v805 = vld [vmem:[%s2] sm:$0xff]
        %807 = vset.pattern.permute.xlu0 0
        %808 = vperm.xlu0 %807, %v805
        %v809 = vpop.permute.xlu0 %808
        %v811 = vadd.f32 %v763, %v809
        %v812 = vadd.f32 %v783, %v809
        %v813 = vadd.f32 %v803, %v809
        %s814 = scalar_lea.vmem %s247, 24 [#allocation2]
        %815 = vst [vmem:[%s814] sm:$0xff] %v811
        %816 = vst [vmem:[%s814 + $0x8] sm:$0xff] %v812
        %817 = vst [vmem:[%s814 + $0x10] sm:$0xff] %v813
        %vm818 = vcmp.lt.s32.totalorder %v269, 16
        %vm819 = vmand %vm818, %vm623
        %v820 = vsel %vm819, 1, 0
        %v821 = vcvt.s32.f32 %v820
        %v823 = vperm.slane %v821, 0
        %v824 = vperm.slane %v821, 1
        %v825 = vperm.slane %v821, 2
        %v829 = vmul.f32 %v811, %v823
        %v830 = vmul.f32 %v812, %v824
        %v831 = vmul.f32 %v813, %v825
        %v832 = vadd.f32 %v829, %v830
        %v833 = vadd.f32 %v832, %v831
        %834 = vadd.xlane.f32.xlu0 %v833
        %v835 = vpop.xlane.xlu0 %834
        %v836 = vadd.f32 %v641, %v835
        %v837 = vmul.f32 %v829, %v811
        %v838 = vmul.f32 %v830, %v812
        %v839 = vmul.f32 %v831, %v813
        %v840 = vadd.f32 %v837, %v838
        %v841 = vadd.f32 %v840, %v839
        %842 = vadd.xlane.f32.xlu0 %v841
        %v843 = vpop.xlane.xlu0 %842
        %v844 = vadd.f32 %v649, %v843
        %v845 = vld [vmem:[%s263] sm:$0xff]
        %v846 = vld [vmem:[%s263 + $0x8] sm:$0xff]
        %v847 = vld [vmem:[%s263 + $0x10] sm:$0xff]
        %v848 = vld [vmem:[%s263 + $0x18] sm:$0xff]
        %s849 = scalar_lea.vmem %s1, 48
        %v850 = vld [vmem:[%s849] sm:$0xff]
        %v851 = vld [vmem:[%s263] sm:$0xff]
        %v852 = vld [vmem:[%s263 + $0x8] sm:$0xff]
        %v853 = vld [vmem:[%s263 + $0x10] sm:$0xff]
        %s854 = scalar_lea.vmem %s1, 56
        %v855 = vld [vmem:[%s854] sm:$0xff]
        %v857 = vsel %vm296, %v855, 0
        %859 = vmatpush.msra.mxu0 0.0
        %860 = vmatpush.msra.mxu0 0.0
        %861 = vmatpush.msra.mxu0 0.0
        %862 = vmatpush.msra.mxu0 0.0
        %863 = vmatpush.msra.mxu0 0.0
        %864 = vmatpush.msra.mxu0 0.0
        %865 = vmatpush.msra.mxu0 0.0
        %866 = vmatpush.msra.mxu0 0.0
        %867 = vmatpush.msra.mxu0 0.0
        %868 = vmatpush.msra.mxu0 0.0
        %869 = vmatpush.msra.mxu0 0.0
        %870 = vmatpush.msra.mxu0 0.0
        %871 = vmatpush.msra.mxu0 0.0
        %872 = vmatpush.msra.mxu0 0.0
        %873 = vmatpush.msra.mxu0 0.0
        %874 = vmatpush.msra.mxu0 %v851
        %875 = vmatmul.f32.gmra.mxu0 %v857
        %v876 = vpop.f32.mrf.mxu0
        %v877 = vadd.f32 0.0, %v876
        %878 = vdwg.mxu0
        %879 = vmatpush.msra.mxu0 0.0
        %880 = vmatpush.msra.mxu0 0.0
        %881 = vmatpush.msra.mxu0 0.0
        %882 = vmatpush.msra.mxu0 0.0
        %883 = vmatpush.msra.mxu0 0.0
        %884 = vmatpush.msra.mxu0 0.0
        %885 = vmatpush.msra.mxu0 0.0
        %886 = vmatpush.msra.mxu0 0.0
        %887 = vmatpush.msra.mxu0 0.0
        %888 = vmatpush.msra.mxu0 0.0
        %889 = vmatpush.msra.mxu0 0.0
        %890 = vmatpush.msra.mxu0 0.0
        %891 = vmatpush.msra.mxu0 0.0
        %892 = vmatpush.msra.mxu0 0.0
        %893 = vmatpush.msra.mxu0 0.0
        %894 = vmatpush.msra.mxu0 %v852
        %895 = vmatmul.f32.gmra.mxu0 %v857
        %v896 = vpop.f32.mrf.mxu0
        %v897 = vadd.f32 0.0, %v896
        %898 = vdwg.mxu0
        %899 = vmatpush.msra.mxu0 0.0
        %900 = vmatpush.msra.mxu0 0.0
        %901 = vmatpush.msra.mxu0 0.0
        %902 = vmatpush.msra.mxu0 0.0
        %903 = vmatpush.msra.mxu0 0.0
        %904 = vmatpush.msra.mxu0 0.0
        %905 = vmatpush.msra.mxu0 0.0
        %906 = vmatpush.msra.mxu0 0.0
        %907 = vmatpush.msra.mxu0 0.0
        %908 = vmatpush.msra.mxu0 0.0
        %909 = vmatpush.msra.mxu0 0.0
        %910 = vmatpush.msra.mxu0 0.0
        %911 = vmatpush.msra.mxu0 0.0
        %912 = vmatpush.msra.mxu0 0.0
        %913 = vmatpush.msra.mxu0 0.0
        %914 = vmatpush.msra.mxu0 %v853
        %915 = vmatmul.f32.gmra.mxu0 %v857
        %v916 = vpop.f32.mrf.mxu0
        %v917 = vadd.f32 0.0, %v916
        %918 = vdwg.mxu0
        %923 = vrot.lane.b32.xlu0 %v845, 127
        %v924 = vpop.permute.xlu0 %923
        %925 = vrot.lane.b32.xlu0 %v846, 127
        %v926 = vpop.permute.xlu0 %925
        %927 = vrot.lane.b32.xlu0 %v847, 127
        %v928 = vpop.permute.xlu0 %927
        %929 = vrot.lane.b32.xlu0 %v848, 127
        %v930 = vpop.permute.xlu0 %929
        %v931 = vsel %vm448, %v924, %v926
        %v932 = vsel %vm448, %v926, %v928
        %v933 = vsel %vm448, %v928, %v930
        %v938 = vsel %vm296, %v850, 0
        %940 = vmatpush.msra.mxu0 0.0
        %941 = vmatpush.msra.mxu0 0.0
        %942 = vmatpush.msra.mxu0 0.0
        %943 = vmatpush.msra.mxu0 0.0
        %944 = vmatpush.msra.mxu0 0.0
        %945 = vmatpush.msra.mxu0 0.0
        %946 = vmatpush.msra.mxu0 0.0
        %947 = vmatpush.msra.mxu0 0.0
        %948 = vmatpush.msra.mxu0 0.0
        %949 = vmatpush.msra.mxu0 0.0
        %950 = vmatpush.msra.mxu0 0.0
        %951 = vmatpush.msra.mxu0 0.0
        %952 = vmatpush.msra.mxu0 0.0
        %953 = vmatpush.msra.mxu0 0.0
        %954 = vmatpush.msra.mxu0 0.0
        %955 = vmatpush.msra.mxu0 %v931
        %956 = vmatmul.f32.gmra.mxu0 %v938
        %v957 = vpop.f32.mrf.mxu0
        %v958 = vadd.f32 %v877, %v957
        %959 = vdwg.mxu0
        %960 = vmatpush.msra.mxu0 0.0
        %961 = vmatpush.msra.mxu0 0.0
        %962 = vmatpush.msra.mxu0 0.0
        %963 = vmatpush.msra.mxu0 0.0
        %964 = vmatpush.msra.mxu0 0.0
        %965 = vmatpush.msra.mxu0 0.0
        %966 = vmatpush.msra.mxu0 0.0
        %967 = vmatpush.msra.mxu0 0.0
        %968 = vmatpush.msra.mxu0 0.0
        %969 = vmatpush.msra.mxu0 0.0
        %970 = vmatpush.msra.mxu0 0.0
        %971 = vmatpush.msra.mxu0 0.0
        %972 = vmatpush.msra.mxu0 0.0
        %973 = vmatpush.msra.mxu0 0.0
        %974 = vmatpush.msra.mxu0 0.0
        %975 = vmatpush.msra.mxu0 %v932
        %976 = vmatmul.f32.gmra.mxu0 %v938
        %v977 = vpop.f32.mrf.mxu0
        %v978 = vadd.f32 %v897, %v977
        %979 = vdwg.mxu0
        %980 = vmatpush.msra.mxu0 0.0
        %981 = vmatpush.msra.mxu0 0.0
        %982 = vmatpush.msra.mxu0 0.0
        %983 = vmatpush.msra.mxu0 0.0
        %984 = vmatpush.msra.mxu0 0.0
        %985 = vmatpush.msra.mxu0 0.0
        %986 = vmatpush.msra.mxu0 0.0
        %987 = vmatpush.msra.mxu0 0.0
        %988 = vmatpush.msra.mxu0 0.0
        %989 = vmatpush.msra.mxu0 0.0
        %990 = vmatpush.msra.mxu0 0.0
        %991 = vmatpush.msra.mxu0 0.0
        %992 = vmatpush.msra.mxu0 0.0
        %993 = vmatpush.msra.mxu0 0.0
        %994 = vmatpush.msra.mxu0 0.0
        %995 = vmatpush.msra.mxu0 %v933
        %996 = vmatmul.f32.gmra.mxu0 %v938
        %v997 = vpop.f32.mrf.mxu0
        %v998 = vadd.f32 %v917, %v997
        %999 = vdwg.mxu0
        %v1000 = vld [vmem:[%s2] sm:$0xff]
        %1002 = vset.pattern.permute.xlu0 0
        %1003 = vperm.xlu0 %1002, %v1000
        %v1004 = vpop.permute.xlu0 %1003
        %v1006 = vadd.f32 %v958, %v1004
        %v1007 = vadd.f32 %v978, %v1004
        %v1008 = vadd.f32 %v998, %v1004
        %s1009 = scalar_lea.vmem %s247, 48 [#allocation2]
        %1010 = vst [vmem:[%s1009] sm:$0xff] %v1006
        %1011 = vst [vmem:[%s1009 + $0x8] sm:$0xff] %v1007
        %1012 = vst [vmem:[%s1009 + $0x10] sm:$0xff] %v1008
        %s1013 = ssub.s32 16, %s604
        %p1014 = scmp.lt.s32.totalorder %s1013, 16
        %s1015 = scalar_select %p1014, %s1013, 16
        %s1016 = smul.u32 %s1015, 17
        %v1017 = vstv %s1016
        %vm1018 = vcmp.lt.s32.totalorder %v266, %v1017
        %vm1019 = vcmp.lt.s32.totalorder %v267, %v1017
        %vm1020 = vcmp.lt.s32.totalorder %v268, %v1017
        %v1021 = vsel %vm1018, 1, 0
        %v1022 = vsel %vm1019, 1, 0
        %v1023 = vsel %vm1020, 1, 0
        %v1024 = vrot.slane %v1022, 7
        %v1025 = vrot.slane %v1023, 6
        %v1026 = vsel %vm619, %v1021, %v1024
        %v1027 = vsel %vm621, %v1026, %v1025
        %vm1028 = vcmp.ne.s32.totalorder %v1027, 0
        %vm1029 = vmand %vm608, %vm1028
        %v1030 = vsel %vm1029, 1, 0
        %v1031 = vcvt.s32.f32 %v1030
        %v1033 = vperm.slane %v1031, 0
        %v1034 = vperm.slane %v1031, 1
        %v1035 = vperm.slane %v1031, 2
        %v1039 = vmul.f32 %v1006, %v1033
        %v1040 = vmul.f32 %v1007, %v1034
        %v1041 = vmul.f32 %v1008, %v1035
        %v1042 = vadd.f32 %v1039, %v1040
        %v1043 = vadd.f32 %v1042, %v1041
        %1044 = vadd.xlane.f32.xlu0 %v1043
        %v1045 = vpop.xlane.xlu0 %1044
        %v1046 = vadd.f32 %v836, %v1045
        %v1047 = vmul.f32 %v1039, %v1006
        %v1048 = vmul.f32 %v1040, %v1007
        %v1049 = vmul.f32 %v1041, %v1008
        %v1050 = vadd.f32 %v1047, %v1048
        %v1051 = vadd.f32 %v1050, %v1049
        %1052 = vadd.xlane.f32.xlu0 %v1051
        %v1053 = vpop.xlane.xlu0 %1052
        %v1054 = vadd.f32 %v844, %v1053
        %v1055 = vld [vmem:[%s263] sm:$0xff]
        %v1056 = vld [vmem:[%s263 + $0x8] sm:$0xff]
        %v1057 = vld [vmem:[%s263 + $0x10] sm:$0xff]
        %s1058 = scalar_lea.vmem %s1, 64
        %v1059 = vld [vmem:[%s1058] sm:$0xff]
        %v1060 = vld [vmem:[%s2] sm:$0xff]
        %1062 = vset.pattern.permute.xlu0 0
        %1063 = vperm.xlu0 %1062, %v1060
        %v1064 = vpop.permute.xlu0 %1063
        %v1067 = vsel %vm296, %v1059, 0
        %1069 = vmatpush.msra.mxu0 0.0
        %1070 = vmatpush.msra.mxu0 0.0
        %1071 = vmatpush.msra.mxu0 0.0
        %1072 = vmatpush.msra.mxu0 0.0
        %1073 = vmatpush.msra.mxu0 0.0
        %1074 = vmatpush.msra.mxu0 0.0
        %1075 = vmatpush.msra.mxu0 0.0
        %1076 = vmatpush.msra.mxu0 0.0
        %1077 = vmatpush.msra.mxu0 0.0
        %1078 = vmatpush.msra.mxu0 0.0
        %1079 = vmatpush.msra.mxu0 0.0
        %1080 = vmatpush.msra.mxu0 0.0
        %1081 = vmatpush.msra.mxu0 0.0
        %1082 = vmatpush.msra.mxu0 0.0
        %1083 = vmatpush.msra.mxu0 0.0
        %1084 = vmatpush.msra.mxu0 %v1055
        %1085 = vmatmul.f32.gmra.mxu0 %v1067
        %v1086 = vpop.f32.mrf.mxu0
        %v1087 = vadd.f32 %v1064, %v1086
        %1088 = vdwg.mxu0
        %1089 = vmatpush.msra.mxu0 0.0
        %1090 = vmatpush.msra.mxu0 0.0
        %1091 = vmatpush.msra.mxu0 0.0
        %1092 = vmatpush.msra.mxu0 0.0
        %1093 = vmatpush.msra.mxu0 0.0
        %1094 = vmatpush.msra.mxu0 0.0
        %1095 = vmatpush.msra.mxu0 0.0
        %1096 = vmatpush.msra.mxu0 0.0
        %1097 = vmatpush.msra.mxu0 0.0
        %1098 = vmatpush.msra.mxu0 0.0
        %1099 = vmatpush.msra.mxu0 0.0
        %1100 = vmatpush.msra.mxu0 0.0
        %1101 = vmatpush.msra.mxu0 0.0
        %1102 = vmatpush.msra.mxu0 0.0
        %1103 = vmatpush.msra.mxu0 0.0
        %1104 = vmatpush.msra.mxu0 %v1056
        %1105 = vmatmul.f32.gmra.mxu0 %v1067
        %v1106 = vpop.f32.mrf.mxu0
        %v1107 = vadd.f32 %v1064, %v1106
        %1108 = vdwg.mxu0
        %1109 = vmatpush.msra.mxu0 0.0
        %1110 = vmatpush.msra.mxu0 0.0
        %1111 = vmatpush.msra.mxu0 0.0
        %1112 = vmatpush.msra.mxu0 0.0
        %1113 = vmatpush.msra.mxu0 0.0
        %1114 = vmatpush.msra.mxu0 0.0
        %1115 = vmatpush.msra.mxu0 0.0
        %1116 = vmatpush.msra.mxu0 0.0
        %1117 = vmatpush.msra.mxu0 0.0
        %1118 = vmatpush.msra.mxu0 0.0
        %1119 = vmatpush.msra.mxu0 0.0
        %1120 = vmatpush.msra.mxu0 0.0
        %1121 = vmatpush.msra.mxu0 0.0
        %1122 = vmatpush.msra.mxu0 0.0
        %1123 = vmatpush.msra.mxu0 0.0
        %1124 = vmatpush.msra.mxu0 %v1057
        %1125 = vmatmul.f32.gmra.mxu0 %v1067
        %v1126 = vpop.f32.mrf.mxu0
        %v1127 = vadd.f32 %v1064, %v1126
        %1128 = vdwg.mxu0
        %s1129 = scalar_lea.vmem %s247, 72 [#allocation2]
        %1130 = vst [vmem:[%s1129] sm:$0xff] %v1087
        %1131 = vst [vmem:[%s1129 + $0x8] sm:$0xff] %v1107
        %1132 = vst [vmem:[%s1129 + $0x10] sm:$0xff] %v1127
        %vm1133 = vmand %vm818, %vm1028
        %v1134 = vsel %vm1133, 1, 0
        %v1135 = vcvt.s32.f32 %v1134
        %v1137 = vperm.slane %v1135, 0
        %v1138 = vperm.slane %v1135, 1
        %v1139 = vperm.slane %v1135, 2
        %v1143 = vmul.f32 %v1087, %v1137
        %v1144 = vmul.f32 %v1107, %v1138
        %v1145 = vmul.f32 %v1127, %v1139
        %v1146 = vadd.f32 %v1143, %v1144
        %v1147 = vadd.f32 %v1146, %v1145
        %1148 = vadd.xlane.f32.xlu0 %v1147
        %v1149 = vpop.xlane.xlu0 %1148
        %v1150 = vadd.f32 %v1046, %v1149
        %v1151 = vmul.f32 %v1143, %v1087
        %v1152 = vmul.f32 %v1144, %v1107
        %v1153 = vmul.f32 %v1145, %v1127
        %v1154 = vadd.f32 %v1151, %v1152
        %v1155 = vadd.f32 %v1154, %v1153
        %1156 = vadd.xlane.f32.xlu0 %v1155
        %v1157 = vpop.xlane.xlu0 %1156
        %v1158 = vadd.f32 %v1054, %v1157
        %vm1159 = vcmask 7168
        %1160 = vst.msk [vmem:[%s254] sm:$0xff] %vm1159, %v1150
        %1161 = vst.msk [vmem:[%s254 + $0x8] sm:$0xff] %vm1159, %v1158
        %s1162 = sand.u32 %s136, 1
        %s1163 = scalar_lea.sflag [#allocation3], %s1162
        %s1164 = sand.u32 %s136, 1
        %s1165 = smul.addr %s1164, 96
        %s1166 = scalar_lea.vmem [#allocation2], %s1165
        %s1167 = sand.u32 %s164, 1
        %s1168 = scalar_lea.sflag [#allocation5], %s1167
        %s1169 = sand.u32 %s164, 1
        %s1170 = smul.addr %s1169, 16
        %s1171 = scalar_lea.vmem [#allocation4], %s1170
        // Predicated region
        $region37: #{tpu_custom_call.1} parent=35 // pred_check
          %p1172 = pneg %p146
        $region38: #{tpu_custom_call.1} parent=35 // pred_check_branch
          %1174 = sbr.rel (%p1172) target = $region40
        $region39: #{tpu_custom_call.1} parent=35 // pred_region
          %1176 = vsyncadd %s1163, 0
          %s1177 = smul.addr %s28, 12
          %s1178 = smul.addr %s27, 12
          %s1179 = sadd.s32 %s1177, %s1178
          %s1180 = smul.addr %s1179, 8
          %s1181 = scalar_lea.hbm %s4, %s1180
          %s1182 = sshll.u32 %s1166, 4
          %s1183 = int_to_ptr.vmem [resolvable:$true] %s1182
          %s1184 = sshll.u32 %s1181, 4
          %s1185 = int_to_ptr.hbm [resolvable:$true] %s1184
          %1190 = dma.vmem_to_hbm [thread:$0]  %s1183, 1536, %s1185, %s1163, 384, 384, 24
        $region40: #{tpu_custom_call.1} parent=35 // pred_fallthru
          _
        // Predicated region
        $region41: #{tpu_custom_call.1} parent=35 // pred_check
          %p1191 = pneg %p174
        $region42: #{tpu_custom_call.1} parent=35 // pred_check_branch
          %1193 = sbr.rel (%p1191) target = $region44
        $region43: #{tpu_custom_call.1} parent=35 // pred_region
          %s1194 = sadd.s32 %s27, %s28
          %1196 = vsyncadd %s1168, 0
          %s1197 = smul.addr %s1194, 2
          %s1198 = smul.addr %s1197, 8
          %s1199 = scalar_lea.hbm %s5, %s1198
          %s1201 = sshll.u32 %s1171, 4
          %s1202 = int_to_ptr.vmem [resolvable:$true] %s1201
          %s1203 = sshll.u32 %s1199, 4
          %s1204 = int_to_ptr.hbm [resolvable:$true] %s1203
          %1206 = dma.vmem_to_hbm [thread:$0]  %s1202, 256, %s1204, %s1168
        $region44: #{tpu_custom_call.1} parent=35 // pred_fallthru
          _
      $region36: #{tpu_custom_call.1} parent=5 // pred_fallthru
        _
      %p1207 = scmp.le.s32.totalorder 2, %s18
      // Predicated region
      $region45: #{tpu_custom_call.1} parent=5 // pred_check
        %p1208 = pneg %p1207
      $region46: #{tpu_custom_call.1} parent=5 // pred_check_branch
        %1210 = sbr.rel (%p1208) target = $region48
      $region47: #{tpu_custom_call.1} parent=5 // pred_region
        %s1211 = ssub.s32 %s18, 2
        // Predicated region
        $region49: #{tpu_custom_call.1} parent=47 // pred_check
          %p1212 = pneg %p152
        $region50: #{tpu_custom_call.1} parent=47 // pred_check_branch
          %1214 = sbr.rel (%p1212) target = $region52
        $region51: #{tpu_custom_call.1} parent=47 // pred_region
          %s1215 = sand.u32 %s137, 1
          %s1216 = scalar_lea.sflag [#allocation3], %s1215
          %s1217 = sand.u32 %s137, 1
          %s1218 = smul.addr %s1217, 96
          %s1219 = scalar_lea.vmem [#allocation2], %s1218
          %1221 = dma.done %s1216, 1536
        $region52: #{tpu_custom_call.1} parent=47 // pred_fallthru
          _
        // Predicated region
        $region53: #{tpu_custom_call.1} parent=47 // pred_check
          %p1222 = pneg %p180
        $region54: #{tpu_custom_call.1} parent=47 // pred_check_branch
          %1224 = sbr.rel (%p1222) target = $region56
        $region55: #{tpu_custom_call.1} parent=47 // pred_region
          %s1225 = sand.u32 %s165, 1
          %s1226 = scalar_lea.sflag [#allocation5], %s1225
          %s1227 = sand.u32 %s165, 1
          %s1228 = smul.addr %s1227, 16
          %s1229 = scalar_lea.vmem [#allocation4], %s1228
          %1231 = dma.done %s1226, 256
        $region56: #{tpu_custom_call.1} parent=47 // pred_fallthru
          _
      $region48: #{tpu_custom_call.1} parent=5 // pred_fallthru
        _
    $region6: #{tpu_custom_call.1} parent=1 // loop_footer
      %s22 = sadd.s32 1, %s18
    $region7: #{tpu_custom_call.1} parent=1 // loop_footer_branch
      %17 = sbr.rel target = $region3
    $region8: #{tpu_custom_call.1} parent=1 // loop_exit
      _
    %1232 = vsyncpa [#allocation3], 1
    %s1233 = scalar_lea.sflag [#allocation3], 1
    %1234 = vsyncpa %s1233, 1
    %1235 = vsyncpa [#allocation5], 1
    %s1236 = scalar_lea.sflag [#allocation5], 1
    %1237 = vsyncpa %s1236, 1

</llo_original>
